<compile_context>
chip_gen: v7x
topology: tpu7x:2x2x1
jax: 0.10.0
libtpu: 0.0.40
codegen_flags: <defaults>
</compile_context>

<pallas_src>
from functools import partial

import jax
import jax.numpy as jnp
from jax import lax
from jax.experimental import pallas as pl
from jax.experimental.pallas import tpu as pltpu

CIN = 3        # RGB input channels of VGG conv1_1
CIN_PAD = 8    # input channels padded to 8 (extra channels / weight cols are 0)
C1 = 64        # lpips.LPIPS(net='vgg').chns[0]
K1 = 9 * CIN_PAD   # 72
K2 = 9 * C1        # 576


def _make_kernel(TH, W):
    """TH = output rows per strip, W = image width (static Python ints)."""
    M1 = (TH + 2) * W          # conv1 pixels: TH output rows + 1 halo row per side
    M2 = TH * W                # conv2 / output pixels per strip

    def kernel(p1_ref, w1_ref, b1_ref, w2_ref, b2_ref, o_ref, h1f, p2t):
        s = pl.program_id(1)
        last = pl.num_programs(1) - 1

        # ---- conv1_1 (3->64), transposed: (64,72) x (72,M1) -> (64,M1) f32 ----
        a1 = jnp.dot(w1_ref[...], p1_ref[...], preferred_element_type=jnp.float32)
        h1 = jnp.maximum(a1 + b1_ref[...], 0.0).astype(jnp.bfloat16)   # (64, M1)

        # Flattened channel-major h1 with one pad lane on each side; position
        # p = 1 + r*W + x  for h1 strip row r (= output row y-1 .. y+TH) col x.
        h1f[:, 1:M1 + 1] = h1

        @pl.when(s == 0)
        def _():  # h1 "row -1" is conv1_2's zero padding, not a conv1_1 output
            h1f[:, 1:1 + W] = jnp.zeros((C1, W), jnp.bfloat16)

        @pl.when(s == last)
        def _():  # h1 "row H" likewise
            h1f[:, 1 + (TH + 1) * W:1 + M1] = jnp.zeros((C1, W), jnp.bfloat16)

        # Column-border masks (shared across taps): x == 0 / x == W-1.
        col = lax.broadcasted_iota(jnp.int32, (1, M2), 1) % W
        left = col == 0
        right = col == (W - 1)

        # ---- conv1_2 im2col, channel-major & lane-dense: each tap is a single
        #      1-pixel lane-shifted slice of h1f; p2t stores are M2 lanes wide.
        for ky in range(3):
            for kx in range(3):
                t = ky * 3 + kx
                v = h1f[:, ky * W + kx: ky * W + kx + M2]          # (64, M2)
                if kx == 0:                                        # col -1 -> 0
                    v = jnp.where(left, jnp.zeros_like(v), v)
                elif kx == 2:                                      # col W  -> 0
                    v = jnp.where(right, jnp.zeros_like(v), v)
                p2t[t * C1:(t + 1) * C1, :] = v

        # ---- conv1_2 (64->64), transposed: (64,576) x (576,M2) -> (64,M2) ----
        a2 = jnp.dot(w2_ref[...], p2t[...], preferred_element_type=jnp.float32)
        h2 = jnp.maximum(a2 + b2_ref[...], 0.0)                    # f32 (64, M2)

        # ---- lpips.normalize_tensor over channels (sublane reduce + 1 EUP op)
        inv = lax.rsqrt(jnp.sum(h2 * h2, axis=0, keepdims=True) + 1e-20)
        o_ref[...] = h2 * inv          # lane-dense (64, M2) f32, NCHW layout
        # F.interpolate(f, (H, W)) is the identity for relu1_2 (no pooling yet).

    return kernel


@partial(jax.jit, static_argnames=("strip_h",))
def perceptual_features(images, shift_rgb, scale_rgb, w1_oihw, b1, w2_oihw, b2,
                        *, strip_h=8):
    """images (n, v, 3, H, W) f32 -> channel-normalized relu1_2 features
    (n, v, 64, H, W) f32 (stored NCHW directly by the kernel)."""
    n_, v_, c_, H, W = images.shape
    B = n_ * v_
    TH = strip_h
    assert H % TH == 0
    ns = H // TH
    M1 = (TH + 2) * W
    M2 = TH * W
    assert M2 % 128 == 0, "strip_h * W must be a multiple of 128 (lane-dense out)"

    # LPIPS ScalingLayer + layout plumbing done in XLA.
    x = images.reshape(B, c_, H, W)
    x = (x - shift_rgb.reshape(1, c_, 1, 1)) / scale_rgb.reshape(1, c_, 1, 1)
    x = jnp.transpose(x, (0, 2, 3, 1))                                  # NHWC f32
    # +2 zero rows top/bottom (1 conv pad + 1 halo), +1 zero col, channels -> 8.
    xp = jnp.pad(x, ((0, 0), (2, 2), (1, 1), (0, CIN_PAD - c_)))

    # Channel-major conv1_1 patches, tap-major rows: (B, 72, H+2, W).
    taps = []
    for ky in range(3):
        for kx in range(3):
            win = xp[:, ky:ky + H + 2, kx:kx + W, :]                    # (B,H+2,W,8)
            taps.append(jnp.transpose(win, (0, 3, 1, 2)))               # (B,8,H+2,W)
    pat = jnp.stack(taps, axis=1).reshape(B, K1, H + 2, W)
    # Overlapping (TH+2)-row strips, flattened: (B, ns, 72, M1) bf16.
    strips = jnp.stack(
        [pat[:, :, s * TH:s * TH + TH + 2, :].reshape(B, K1, M1) for s in range(ns)],
        axis=1).astype(jnp.bfloat16)

    # Transposed weights (out-channel major, tap-major / in-channel-minor cols).
    w1t = jnp.transpose(w1_oihw, (0, 2, 3, 1))                          # (64,3,3,3)
    w1t = jnp.pad(w1t, ((0, 0), (0, 0), (0, 0), (0, CIN_PAD - c_)))
    w1t = w1t.reshape(C1, K1).astype(jnp.bfloat16)
    w2t = jnp.transpose(w2_oihw, (0, 2, 3, 1)).reshape(C1, K2).astype(jnp.bfloat16)
    b1c = b1.reshape(C1, 1).astype(jnp.float32)
    b2c = b2.reshape(C1, 1).astype(jnp.float32)

    # VMEM budget: double-buffered in/out blocks + weights + scratch (p2t dominates).
    need = (2 * (K1 * M1 * 2 + C1 * M2 * 4)
            + 2 * ((C1 * K1 + C1 * K2) * 2 + 2 * C1 * 4)
            + C1 * (M1 + 2) * 2 + K2 * M2 * 2)
    vmem_limit = int(min(64 * 1024 * 1024, max(32 * 1024 * 1024, 2 * need)))

    out = pl.pallas_call(
        _make_kernel(TH, W),
        # (B, 64, H*W) has the same HBM layout as NCHW (B, 64, H, W).
        out_shape=jax.ShapeDtypeStruct((B, C1, H * W), jnp.float32),
        grid_spec=pltpu.PrefetchScalarGridSpec(
            num_scalar_prefetch=0,
            grid=(B, ns),
            in_specs=[
                pl.BlockSpec((None, None, K1, M1), lambda b, s: (b, s, 0, 0)),
                # invariant weights/biases (constant index_map -> fetched once)
                pl.BlockSpec((C1, K1), lambda b, s: (0, 0)),
                pl.BlockSpec((C1, 1), lambda b, s: (0, 0)),
                pl.BlockSpec((C1, K2), lambda b, s: (0, 0)),
                pl.BlockSpec((C1, 1), lambda b, s: (0, 0)),
            ],
            out_specs=pl.BlockSpec((None, C1, M2), lambda b, s: (b, 0, s)),
            scratch_shapes=[
                pltpu.VMEM((C1, M1 + 2), jnp.bfloat16),   # flattened ch-major h1
                pltpu.VMEM((K2, M2), jnp.bfloat16),       # conv1_2 im2col (ch-major)
            ],
        ),
        compiler_params=pltpu.CompilerParams(
            dimension_semantics=("parallel", "parallel"),
            vmem_limit_bytes=vmem_limit),
    )(strips, w1t, b1c, w2t, b2c)

    # Already channel-major: no post-kernel transpose.
    return out.reshape(n_, v_, C1, H, W)


if __name__ == "__main__":
    n, v, c, h, w = 2, 2, CIN, 32, 16           # H = 4*strip_h -> interior strips hit
    key = jax.random.PRNGKey(0)
    k_img, k_w1, k_b1, k_w2, k_b2 = jax.random.split(key, 5)

    images = jax.random.uniform(k_img, (n, v, c, h, w), jnp.float32, -1.0, 1.0)

    # Fixed LPIPS ScalingLayer buffers.
    shift_rgb = jnp.array([-0.030, -0.088, -0.188], jnp.float32)
    scale_rgb = jnp.array([0.458, 0.448, 0.450], jnp.float32)

    # Deterministic synthetic VGG16 conv1_1 / conv1_2 weights (OIHW, as in torch).
    w1_oihw = jax.random.normal(k_w1, (C1, c, 3, 3), jnp.float32) * 0.2
    b1_vec = jax.random.normal(k_b1, (C1,), jnp.float32) * 0.1
    w2_oihw = jax.random.normal(k_w2, (C1, C1, 3, 3), jnp.float32) * 0.05
    b2_vec = jax.random.normal(k_b2, (C1,), jnp.float32) * 0.1

    feats = jax.block_until_ready(
        perceptual_features(images, shift_rgb, scale_rgb,
                            w1_oihw, b1_vec, w2_oihw, b2_vec, strip_h=8))

    # Pure-JAX reference with matching numerics (bf16 matmul operands, f32 accum).
    def reference(imgs):
        x = imgs.reshape(n * v, c, h, w)
        x = (x - shift_rgb.reshape(1, c, 1, 1)) / scale_rgb.reshape(1, c, 1, 1)

        def conv(xx, w_oihw, b):
            y = lax.conv_general_dilated(
                xx.astype(jnp.bfloat16), w_oihw.astype(jnp.bfloat16),
                (1, 1), ((1, 1), (1, 1)),
                dimension_numbers=("NCHW", "OIHW", "NCHW"),
                preferred_element_type=jnp.float32)
            return jax.nn.relu(y + b.reshape(1, -1, 1, 1))

        f = conv(conv(x, w1_oihw, b1_vec), w2_oihw, b2_vec)
        nf = jnp.sqrt(jnp.sum(f * f, axis=1, keepdims=True))
        f = f / (nf + 1e-10)
        return f.reshape(n, v, C1, h, w)

    ref = jax.block_until_ready(reference(images))
    assert feats.shape == (n, v, C1, h, w)
    err = float(jnp.max(jnp.abs(feats - ref)))
    assert err < 1e-2, f"max abs err {err}"
    print("KERNEL_OK")
</pallas_src>

<mosaic_0001>
module attributes {stable_mosaic.version = 11 : i64} {
  func.func @kernel(%arg0: i32, %arg1: i32, %arg2: memref<1x1x72x160xbf16, #tpu.memory_space<vmem>>, %arg3: memref<64x72xbf16, #tpu.memory_space<vmem>>, %arg4: memref<64x1xf32, #tpu.memory_space<vmem>>, %arg5: memref<64x576xbf16, #tpu.memory_space<vmem>>, %arg6: memref<64x1xf32, #tpu.memory_space<vmem>>, %arg7: memref<1x64x128xf32, #tpu.memory_space<vmem>>, %arg8: memref<64x162xbf16, #tpu.memory_space<vmem>>, %arg9: memref<576x128xbf16, #tpu.memory_space<vmem>>) attributes {dimension_semantics = [#tpu.dimension_semantics<parallel>, #tpu.dimension_semantics<parallel>], iteration_bounds = array<i64: 4, 4>, scalar_prefetch = 0 : i64, scratch_operands = 2 : i64, tpu.core_type = #tpu.core_type<tc>, window_params = [{transform_indices = @transform_0, window_bounds = array<i64: 1, 1, 72, 160>}, {pipeline_mode = #tpu.pipeline_mode<synchronous>, transform_indices = @transform_1, window_bounds = array<i64: 64, 72>}, {pipeline_mode = #tpu.pipeline_mode<synchronous>, transform_indices = @transform_2, window_bounds = array<i64: 64, 1>}, {pipeline_mode = #tpu.pipeline_mode<synchronous>, transform_indices = @transform_3, window_bounds = array<i64: 64, 576>}, {pipeline_mode = #tpu.pipeline_mode<synchronous>, transform_indices = @transform_4, window_bounds = array<i64: 64, 1>}, {transform_indices = @transform_5, window_bounds = array<i64: 1, 64, 128>}]} {
    %c0 = arith.constant 0 : index
    %c0_0 = arith.constant 0 : index
    %0 = vector.load %arg3[%c0, %c0_0] : memref<64x72xbf16, #tpu.memory_space<vmem>>, vector<64x72xbf16>
    %c0_1 = arith.constant 0 : index
    %c0_2 = arith.constant 0 : index
    %c0_3 = arith.constant 0 : index
    %c0_4 = arith.constant 0 : index
    %1 = vector.load %arg2[%c0_1, %c0_2, %c0_3, %c0_4] : memref<1x1x72x160xbf16, #tpu.memory_space<vmem>>, vector<1x1x72x160xbf16>
    %2 = vector.shape_cast %1 : vector<1x1x72x160xbf16> to vector<72x160xbf16>
    %cst = arith.constant dense<0.000000e+00> : vector<64x160xf32>
    %3 = tpu.matmul %0, %2, %cst {dimension_numbers = #tpu.dot_dimension_numbers<[1], [0], [0], [1], [0, 0, 1, 1], [], []>} : vector<64x72xbf16>, vector<72x160xbf16>, vector<64x160xf32> -> vector<64x160xf32>
    %c0_5 = arith.constant 0 : index
    %c0_6 = arith.constant 0 : index
    %4 = vector.load %arg4[%c0_5, %c0_6] : memref<64x1xf32, #tpu.memory_space<vmem>>, vector<64x1xf32>
    %5 = vector.broadcast %4 : vector<64x1xf32> to vector<64x160xf32>
    %6 = arith.addf %3, %5 : vector<64x160xf32>
    %cst_7 = arith.constant 0.000000e+00 : f32
    %7 = vector.broadcast %cst_7 : f32 to vector<64x160xf32>
    %8 = arith.maximumf %6, %7 : vector<64x160xf32>
    %9 = arith.truncf %8 : vector<64x160xf32> to vector<64x160xbf16>
    %c0_8 = arith.constant 0 : index
    %c1 = arith.constant 1 : index
    %10 = vector.load %arg8[%c0_8, %c1] : memref<64x162xbf16, #tpu.memory_space<vmem>>, vector<64x160xbf16>
    tpu.vector_store %arg8[%c0_8, %c1], %9 {strides = array<i32>} : memref<64x162xbf16, #tpu.memory_space<vmem>>, vector<64x160xbf16>,
    %c0_i32 = arith.constant 0 : i32
    %11 = arith.cmpi eq, %arg1, %c0_i32 : i32
    %12 = arith.extui %11 : i1 to i32
    %c0_i32_9 = arith.constant 0 : i32
    %13 = arith.cmpi ne, %12, %c0_i32_9 : i32
    scf.if %13 {
      %cst_56 = arith.constant 0.000000e+00 : bf16
      %99 = vector.broadcast %cst_56 : bf16 to vector<64x16xbf16>
      %c0_57 = arith.constant 0 : index
      %c1_58 = arith.constant 1 : index
      %100 = vector.load %arg8[%c0_57, %c1_58] : memref<64x162xbf16, #tpu.memory_space<vmem>>, vector<64x16xbf16>
      tpu.vector_store %arg8[%c0_57, %c1_58], %99 {strides = array<i32>} : memref<64x162xbf16, #tpu.memory_space<vmem>>, vector<64x16xbf16>,
    } else {
    }
    %c3_i32 = arith.constant 3 : i32
    %14 = arith.cmpi eq, %arg1, %c3_i32 : i32
    %15 = arith.extui %14 : i1 to i32
    %c0_i32_10 = arith.constant 0 : i32
    %16 = arith.cmpi ne, %15, %c0_i32_10 : i32
    scf.if %16 {
      %cst_56 = arith.constant 0.000000e+00 : bf16
      %99 = vector.broadcast %cst_56 : bf16 to vector<64x16xbf16>
      %c0_57 = arith.constant 0 : index
      %c145 = arith.constant 145 : index
      %100 = vector.load %arg8[%c0_57, %c145] : memref<64x162xbf16, #tpu.memory_space<vmem>>, vector<64x16xbf16>
      tpu.vector_store %arg8[%c0_57, %c145], %99 {strides = array<i32>} : memref<64x162xbf16, #tpu.memory_space<vmem>>, vector<64x16xbf16>,
    } else {
    }
    %17 = tpu.iota {dimensions = array<i32: 1>} : vector<1x128xi32>
    %c16_i32 = arith.constant 16 : i32
    %c0_i32_11 = arith.constant 0 : i32
    %18 = arith.cmpi eq, %c16_i32, %c0_i32_11 : i32
    %c1_i32 = arith.constant 1 : i32
    %19 = arith.select %18, %c1_i32, %c16_i32 : i32
    %20 = vector.broadcast %19 : i32 to vector<1x128xi32>
    %21 = arith.remsi %17, %20 : vector<1x128xi32>
    %c0_i32_12 = arith.constant 0 : i32
    %22 = vector.broadcast %c0_i32_12 : i32 to vector<1x128xi32>
    %23 = arith.cmpi ne, %21, %22 : vector<1x128xi32>
    %c0_i32_13 = arith.constant 0 : i32
    %24 = vector.broadcast %c0_i32_13 : i32 to vector<1x128xi32>
    %25 = arith.cmpi slt, %21, %24 : vector<1x128xi32>
    %c0_i32_14 = arith.constant 0 : i32
    %26 = arith.cmpi slt, %19, %c0_i32_14 : i32
    %27 = vector.broadcast %26 : i1 to vector<1x128xi1>
    %28 = vector.broadcast %27 : vector<1x128xi1> to vector<1x128xi1>
    %29 = arith.xori %25, %28 : vector<1x128xi1>
    %30 = arith.andi %29, %23 : vector<1x128xi1>
    %31 = vector.broadcast %19 : i32 to vector<1x128xi32>
    %32 = arith.addi %21, %31 : vector<1x128xi32>
    %33 = arith.select %30, %32, %21 : vector<1x128xi1>, vector<1x128xi32>
    %c0_i32_15 = arith.constant 0 : i32
    %34 = vector.broadcast %c0_i32_15 : i32 to vector<1x128xi32>
    %35 = arith.cmpi eq, %33, %34 : vector<1x128xi32>
    %c15_i32 = arith.constant 15 : i32
    %36 = vector.broadcast %c15_i32 : i32 to vector<1x128xi32>
    %37 = arith.cmpi eq, %33, %36 : vector<1x128xi32>
    %c0_16 = arith.constant 0 : index
    %c0_17 = arith.constant 0 : index
    %38 = vector.load %arg8[%c0_16, %c0_17] : memref<64x162xbf16, #tpu.memory_space<vmem>>, vector<64x128xbf16>
    %cst_18 = arith.constant 0.000000e+00 : bf16
    %39 = vector.broadcast %cst_18 : bf16 to vector<64x128xbf16>
    %40 = vector.shape_cast %35 : vector<1x128xi1> to vector<1x128xi1>
    %41 = vector.broadcast %40 : vector<1x128xi1> to vector<64x128xi1>
    %42 = arith.select %41, %39, %38 : vector<64x128xi1>, vector<64x128xbf16>
    %c0_19 = arith.constant 0 : index
    %c0_20 = arith.constant 0 : index
    %43 = vector.load %arg9[%c0_19, %c0_20] : memref<576x128xbf16, #tpu.memory_space<vmem>>, vector<64x128xbf16>
    tpu.vector_store %arg9[%c0_19, %c0_20], %42 {strides = array<i32>} : memref<576x128xbf16, #tpu.memory_space<vmem>>, vector<64x128xbf16>,
    %c0_21 = arith.constant 0 : index
    %c1_22 = arith.constant 1 : index
    %44 = vector.load %arg8[%c0_21, %c1_22] : memref<64x162xbf16, #tpu.memory_space<vmem>>, vector<64x128xbf16>
    %c64 = arith.constant 64 : index
    %c0_23 = arith.constant 0 : index
    %45 = vector.load %arg9[%c64, %c0_23] : memref<576x128xbf16, #tpu.memory_space<vmem>>, vector<64x128xbf16>
    tpu.vector_store %arg9[%c64, %c0_23], %44 {strides = array<i32>} : memref<576x128xbf16, #tpu.memory_space<vmem>>, vector<64x128xbf16>,
    %c0_24 = arith.constant 0 : index
    %c2 = arith.constant 2 : index
    %46 = vector.load %arg8[%c0_24, %c2] : memref<64x162xbf16, #tpu.memory_space<vmem>>, vector<64x128xbf16>
    %cst_25 = arith.constant 0.000000e+00 : bf16
    %47 = vector.broadcast %cst_25 : bf16 to vector<64x128xbf16>
    %48 = vector.shape_cast %37 : vector<1x128xi1> to vector<1x128xi1>
    %49 = vector.broadcast %48 : vector<1x128xi1> to vector<64x128xi1>
    %50 = arith.select %49, %47, %46 : vector<64x128xi1>, vector<64x128xbf16>
    %c128 = arith.constant 128 : index
    %c0_26 = arith.constant 0 : index
    %51 = vector.load %arg9[%c128, %c0_26] : memref<576x128xbf16, #tpu.memory_space<vmem>>, vector<64x128xbf16>
    tpu.vector_store %arg9[%c128, %c0_26], %50 {strides = array<i32>} : memref<576x128xbf16, #tpu.memory_space<vmem>>, vector<64x128xbf16>,
    %c0_27 = arith.constant 0 : index
    %c16 = arith.constant 16 : index
    %52 = vector.load %arg8[%c0_27, %c16] : memref<64x162xbf16, #tpu.memory_space<vmem>>, vector<64x128xbf16>
    %cst_28 = arith.constant 0.000000e+00 : bf16
    %53 = vector.broadcast %cst_28 : bf16 to vector<64x128xbf16>
    %54 = vector.shape_cast %35 : vector<1x128xi1> to vector<1x128xi1>
    %55 = vector.broadcast %54 : vector<1x128xi1> to vector<64x128xi1>
    %56 = arith.select %55, %53, %52 : vector<64x128xi1>, vector<64x128xbf16>
    %c192 = arith.constant 192 : index
    %c0_29 = arith.constant 0 : index
    %57 = vector.load %arg9[%c192, %c0_29] : memref<576x128xbf16, #tpu.memory_space<vmem>>, vector<64x128xbf16>
    tpu.vector_store %arg9[%c192, %c0_29], %56 {strides = array<i32>} : memref<576x128xbf16, #tpu.memory_space<vmem>>, vector<64x128xbf16>,
    %c0_30 = arith.constant 0 : index
    %c17 = arith.constant 17 : index
    %58 = vector.load %arg8[%c0_30, %c17] : memref<64x162xbf16, #tpu.memory_space<vmem>>, vector<64x128xbf16>
    %c256 = arith.constant 256 : index
    %c0_31 = arith.constant 0 : index
    %59 = vector.load %arg9[%c256, %c0_31] : memref<576x128xbf16, #tpu.memory_space<vmem>>, vector<64x128xbf16>
    tpu.vector_store %arg9[%c256, %c0_31], %58 {strides = array<i32>} : memref<576x128xbf16, #tpu.memory_space<vmem>>, vector<64x128xbf16>,
    %c0_32 = arith.constant 0 : index
    %c18 = arith.constant 18 : index
    %60 = vector.load %arg8[%c0_32, %c18] : memref<64x162xbf16, #tpu.memory_space<vmem>>, vector<64x128xbf16>
    %cst_33 = arith.constant 0.000000e+00 : bf16
    %61 = vector.broadcast %cst_33 : bf16 to vector<64x128xbf16>
    %62 = vector.shape_cast %37 : vector<1x128xi1> to vector<1x128xi1>
    %63 = vector.broadcast %62 : vector<1x128xi1> to vector<64x128xi1>
    %64 = arith.select %63, %61, %60 : vector<64x128xi1>, vector<64x128xbf16>
    %c320 = arith.constant 320 : index
    %c0_34 = arith.constant 0 : index
    %65 = vector.load %arg9[%c320, %c0_34] : memref<576x128xbf16, #tpu.memory_space<vmem>>, vector<64x128xbf16>
    tpu.vector_store %arg9[%c320, %c0_34], %64 {strides = array<i32>} : memref<576x128xbf16, #tpu.memory_space<vmem>>, vector<64x128xbf16>,
    %c0_35 = arith.constant 0 : index
    %c32 = arith.constant 32 : index
    %66 = vector.load %arg8[%c0_35, %c32] : memref<64x162xbf16, #tpu.memory_space<vmem>>, vector<64x128xbf16>
    %cst_36 = arith.constant 0.000000e+00 : bf16
    %67 = vector.broadcast %cst_36 : bf16 to vector<64x128xbf16>
    %68 = vector.shape_cast %35 : vector<1x128xi1> to vector<1x128xi1>
    %69 = vector.broadcast %68 : vector<1x128xi1> to vector<64x128xi1>
    %70 = arith.select %69, %67, %66 : vector<64x128xi1>, vector<64x128xbf16>
    %c384 = arith.constant 384 : index
    %c0_37 = arith.constant 0 : index
    %71 = vector.load %arg9[%c384, %c0_37] : memref<576x128xbf16, #tpu.memory_space<vmem>>, vector<64x128xbf16>
    tpu.vector_store %arg9[%c384, %c0_37], %70 {strides = array<i32>} : memref<576x128xbf16, #tpu.memory_space<vmem>>, vector<64x128xbf16>,
    %c0_38 = arith.constant 0 : index
    %c33 = arith.constant 33 : index
    %72 = vector.load %arg8[%c0_38, %c33] : memref<64x162xbf16, #tpu.memory_space<vmem>>, vector<64x128xbf16>
    %c448 = arith.constant 448 : index
    %c0_39 = arith.constant 0 : index
    %73 = vector.load %arg9[%c448, %c0_39] : memref<576x128xbf16, #tpu.memory_space<vmem>>, vector<64x128xbf16>
    tpu.vector_store %arg9[%c448, %c0_39], %72 {strides = array<i32>} : memref<576x128xbf16, #tpu.memory_space<vmem>>, vector<64x128xbf16>,
    %c0_40 = arith.constant 0 : index
    %c34 = arith.constant 34 : index
    %74 = vector.load %arg8[%c0_40, %c34] : memref<64x162xbf16, #tpu.memory_space<vmem>>, vector<64x128xbf16>
    %cst_41 = arith.constant 0.000000e+00 : bf16
    %75 = vector.broadcast %cst_41 : bf16 to vector<64x128xbf16>
    %76 = vector.shape_cast %37 : vector<1x128xi1> to vector<1x128xi1>
    %77 = vector.broadcast %76 : vector<1x128xi1> to vector<64x128xi1>
    %78 = arith.select %77, %75, %74 : vector<64x128xi1>, vector<64x128xbf16>
    %c512 = arith.constant 512 : index
    %c0_42 = arith.constant 0 : index
    %79 = vector.load %arg9[%c512, %c0_42] : memref<576x128xbf16, #tpu.memory_space<vmem>>, vector<64x128xbf16>
    tpu.vector_store %arg9[%c512, %c0_42], %78 {strides = array<i32>} : memref<576x128xbf16, #tpu.memory_space<vmem>>, vector<64x128xbf16>,
    %c0_43 = arith.constant 0 : index
    %c0_44 = arith.constant 0 : index
    %80 = vector.load %arg5[%c0_43, %c0_44] : memref<64x576xbf16, #tpu.memory_space<vmem>>, vector<64x576xbf16>
    %c0_45 = arith.constant 0 : index
    %c0_46 = arith.constant 0 : index
    %81 = vector.load %arg9[%c0_45, %c0_46] : memref<576x128xbf16, #tpu.memory_space<vmem>>, vector<576x128xbf16>
    %cst_47 = arith.constant dense<0.000000e+00> : vector<64x128xf32>
    %82 = tpu.matmul %80, %81, %cst_47 {dimension_numbers = #tpu.dot_dimension_numbers<[1], [0], [0], [1], [0, 0, 1, 1], [], []>} : vector<64x576xbf16>, vector<576x128xbf16>, vector<64x128xf32> -> vector<64x128xf32>
    %c0_48 = arith.constant 0 : index
    %c0_49 = arith.constant 0 : index
    %83 = vector.load %arg6[%c0_48, %c0_49] : memref<64x1xf32, #tpu.memory_space<vmem>>, vector<64x1xf32>
    %84 = vector.broadcast %83 : vector<64x1xf32> to vector<64x128xf32>
    %85 = arith.addf %82, %84 : vector<64x128xf32>
    %cst_50 = arith.constant 0.000000e+00 : f32
    %86 = vector.broadcast %cst_50 : f32 to vector<64x128xf32>
    %87 = arith.maximumf %85, %86 : vector<64x128xf32>
    %88 = arith.mulf %87, %87 : vector<64x128xf32>
    %cst_51 = arith.constant dense<0.000000e+00> : vector<128xf32>
    %89 = vector.multi_reduction <add>, %88, %cst_51 [0] : vector<64x128xf32> to vector<128xf32>
    %90 = vector.shape_cast %89 : vector<128xf32> to vector<1x128xf32>
    %cst_52 = arith.constant 9.99999968E-21 : f32
    %91 = vector.broadcast %cst_52 : f32 to vector<1x128xf32>
    %92 = arith.addf %90, %91 : vector<1x128xf32>
    %93 = math.rsqrt %92 : vector<1x128xf32>
    %94 = vector.broadcast %93 : vector<1x128xf32> to vector<64x128xf32>
    %95 = arith.mulf %87, %94 : vector<64x128xf32>
    %c0_53 = arith.constant 0 : index
    %c0_54 = arith.constant 0 : index
    %c0_55 = arith.constant 0 : index
    %96 = vector.load %arg7[%c0_53, %c0_54, %c0_55] : memref<1x64x128xf32, #tpu.memory_space<vmem>>, vector<1x64x128xf32>
    %97 = vector.shape_cast %96 : vector<1x64x128xf32> to vector<64x128xf32>
    %98 = vector.shape_cast %95 : vector<64x128xf32> to vector<1x64x128xf32>
    tpu.vector_store %arg7[%c0_53, %c0_54, %c0_55], %98 {strides = array<i32>} : memref<1x64x128xf32, #tpu.memory_space<vmem>>, vector<1x64x128xf32>,
    return
  }
  func.func @transform_0(%arg0: i32, %arg1: i32) -> (i32, i32, i32, i32) {
    %c0_i32 = arith.constant 0 : i32
    %c0_i32_0 = arith.constant 0 : i32
    %c0_i32_1 = arith.constant 0 : i32
    return %arg0, %arg1, %c0_i32, %c0_i32_0 : i32, i32, i32, i32
  }
  func.func @transform_1(%arg0: i32, %arg1: i32) -> (i32, i32) {
    %c0_i32 = arith.constant 0 : i32
    %c0_i32_0 = arith.constant 0 : i32
    %c0_i32_1 = arith.constant 0 : i32
    return %c0_i32, %c0_i32_0 : i32, i32
  }
  func.func @transform_2(%arg0: i32, %arg1: i32) -> (i32, i32) {
    %c0_i32 = arith.constant 0 : i32
    %c0_i32_0 = arith.constant 0 : i32
    %c0_i32_1 = arith.constant 0 : i32
    return %c0_i32, %c0_i32_0 : i32, i32
  }
  func.func @transform_3(%arg0: i32, %arg1: i32) -> (i32, i32) {
    %c0_i32 = arith.constant 0 : i32
    %c0_i32_0 = arith.constant 0 : i32
    %c0_i32_1 = arith.constant 0 : i32
    return %c0_i32, %c0_i32_0 : i32, i32
  }
  func.func @transform_4(%arg0: i32, %arg1: i32) -> (i32, i32) {
    %c0_i32 = arith.constant 0 : i32
    %c0_i32_0 = arith.constant 0 : i32
    %c0_i32_1 = arith.constant 0 : i32
    return %c0_i32, %c0_i32_0 : i32, i32
  }
  func.func @transform_5(%arg0: i32, %arg1: i32) -> (i32, i32, i32) {
    %c0_i32 = arith.constant 0 : i32
    %c0_i32_0 = arith.constant 0 : i32
    return %arg0, %c0_i32, %arg1 : i32, i32, i32
  }
}

</mosaic_0001>

<llo_original>
// kernel: perceptual_features.1
$region0: #{perceptual_features.1}
  #allocation0 [shape = 'u32[]', space=smem, size = 0x4, offset = 0x4, fixed_abs, tag = 'smem constant byte address 0x4 - core index']
  #allocation1 [shape = 'u32[144,128]{1,0:T(1,128)}', space=vmem, size = 0x12000, scoped, tag = 'internal scratch']
  #allocation2 [shape = 'bf16[64,162]{1,0:T(16,128)(2,1)}', space=vmem, size = 0x8000, scoped, tag = 'scratch operand']
  #allocation3 [shape = 'bf16[576,128]{1,0:T(16,128)(2,1)}', space=vmem, size = 0x24000, scoped, tag = 'scratch operand']
  %s0 = inlined_call_operand.vmem [shape: bf16[4,4,72,160], index: 0, kind: input, shape index: {}]
  %s1 = inlined_call_operand.vmem [shape: bf16[64,72], index: 1, kind: input, shape index: {}]
  %s2 = inlined_call_operand.vmem [shape: f32[64,1], index: 2, kind: input, shape index: {}]
  %s3 = inlined_call_operand.vmem [shape: bf16[64,576], index: 3, kind: input, shape index: {}]
  %s4 = inlined_call_operand.vmem [shape: f32[64,1], index: 4, kind: input, shape index: {}]
  %s5 = inlined_call_operand.vmem [shape: f32[4,64,512], index: 5, kind: output, shape index: {}]
  %s6 = sld [smem:[#allocation0]]
  $region95: #{perceptual_features.1} parent=0
    _
  %s8 = ssub.s32 1, %s6
  %s9 = scalar_select 0, %s8, %s6
  $region1: #{perceptual_features.1} parent=0
    #allocation4 [shape = 'u8[65536]{0}', space=vmem, size = 0x10000, scoped, tag = 'output window, operand 0']
    loop: start=0, step=1, limit=18
    $region2: #{perceptual_features.1} parent=1 // loop_pre_header
      _
    $region3: #{perceptual_features.1} parent=1 // loop_header
      %s11 = sphi 0, %s15
      %p12 = scmp.ge.s32.totalorder %s11, 18
      %s18 = sphi 0, %s30
      %s19 = sphi 0, %s26
      %s20 = sphi 0, %s18
      %s21 = sphi 0, %s19
      %s22 = sphi 0, %s20
      %s23 = sphi 0, %s21
      %s35 = sphi 0, %s37
      %s38 = sphi 0, %s35
      %s39 = sphi 0, %s38
      %s55 = sphi 0, %s39
      %s59 = sphi 0, %s59
      %s61 = sphi 0, %s59
      %s62 = sphi 0, %s61
      %s76 = sphi 0, %s62
      %s80 = sphi 0, %s80
      %s82 = sphi 0, %s80
      %s83 = sphi 0, %s82
      %s97 = sphi 0, %s83
      %s101 = sphi 0, %s101
      %s103 = sphi 0, %s101
      %s104 = sphi 0, %s103
      %s118 = sphi 0, %s104
      %s122 = sphi 0, %s122
      %s124 = sphi 0, %s122
      %s125 = sphi 0, %s124
      %s139 = sphi 0, %s125
      %s147 = sphi 0, %s149
      %s150 = sphi 0, %s147
      %s151 = sphi 0, %s150
      %s167 = sphi 0, %s151
    $region4: #{perceptual_features.1} parent=1 // loop_header_branch
      %14 = sbr.rel (%p12) target = $region8
    $region5: #{perceptual_features.1} parent=1 // loop_body
      %s16 = ssub.s32 %s11, 1
      %s17 = ssub.s32 %s11, 2
      %s24 = sadd.s32 1, %s19
      %p25 = scmp.ge.s32.totalorder %s24, 4
      %s26 = scalar_select %p25, 0, %s24
      %s27 = sadd.s32 1, %s18
      %s28 = scalar_select %p25, %s27, %s18
      %p29 = scmp.ge.s32.totalorder %s28, 4
      %s30 = scalar_select %p29, 0, %s28
      %s31 = ssub.s32 %s18, %s30
      %s32 = ssub.s32 %s19, %s26
      %s33 = sor.u32 %s31, %s32
      %p34 = scmp.eq.s32.totalorder %s33, 0
      %s36 = sadd.s32 %s35, 1
      %s37 = scalar_select %p34, %s35, %s36
      %p40 = pneg %p34
      %p41 = scmp.eq.s32.totalorder %s11, 15
      %p42 = por %p40, %p41
      %p43 = scmp.ne.s32.totalorder %s35, %s38
      %p44 = scmp.eq.s32.totalorder %s11, 0
      %p45 = por %p43, %p44
      %p46 = scmp.ne.s32.totalorder %s35, %s38
      %p47 = scmp.eq.s32.totalorder %s16, 15
      %p48 = por %p46, %p47
      %p49 = scmp.ne.s32.totalorder %s38, %s39
      %p50 = scmp.eq.s32.totalorder %s16, 0
      %p51 = por %p49, %p50
      %p52 = scmp.ne.s32.totalorder %s38, %s39
      %p53 = scmp.eq.s32.totalorder %s17, 15
      %p54 = por %p52, %p53
      %p56 = scmp.ne.s32.totalorder %s39, %s55
      %p57 = scmp.eq.s32.totalorder %s17, 0
      %p58 = por %p56, %p57
      %s60 = sadd.s32 %s59, 1
      %p63 = scmp.eq.s32.totalorder %s11, 15
      %p64 = scmp.ne.s32.totalorder %s59, %s61
      %p65 = scmp.eq.s32.totalorder %s11, 0
      %p66 = por %p64, %p65
      %p67 = scmp.ne.s32.totalorder %s59, %s61
      %p68 = scmp.eq.s32.totalorder %s16, 15
      %p69 = por %p67, %p68
      %p70 = scmp.ne.s32.totalorder %s61, %s62
      %p71 = scmp.eq.s32.totalorder %s16, 0
      %p72 = por %p70, %p71
      %p73 = scmp.ne.s32.totalorder %s61, %s62
      %p74 = scmp.eq.s32.totalorder %s17, 15
      %p75 = por %p73, %p74
      %p77 = scmp.ne.s32.totalorder %s62, %s76
      %p78 = scmp.eq.s32.totalorder %s17, 0
      %p79 = por %p77, %p78
      %s81 = sadd.s32 %s80, 1
      %p84 = scmp.eq.s32.totalorder %s11, 15
      %p85 = scmp.ne.s32.totalorder %s80, %s82
      %p86 = scmp.eq.s32.totalorder %s11, 0
      %p87 = por %p85, %p86
      %p88 = scmp.ne.s32.totalorder %s80, %s82
      %p89 = scmp.eq.s32.totalorder %s16, 15
      %p90 = por %p88, %p89
      %p91 = scmp.ne.s32.totalorder %s82, %s83
      %p92 = scmp.eq.s32.totalorder %s16, 0
      %p93 = por %p91, %p92
      %p94 = scmp.ne.s32.totalorder %s82, %s83
      %p95 = scmp.eq.s32.totalorder %s17, 15
      %p96 = por %p94, %p95
      %p98 = scmp.ne.s32.totalorder %s83, %s97
      %p99 = scmp.eq.s32.totalorder %s17, 0
      %p100 = por %p98, %p99
      %s102 = sadd.s32 %s101, 1
      %p105 = scmp.eq.s32.totalorder %s11, 15
      %p106 = scmp.ne.s32.totalorder %s101, %s103
      %p107 = scmp.eq.s32.totalorder %s11, 0
      %p108 = por %p106, %p107
      %p109 = scmp.ne.s32.totalorder %s101, %s103
      %p110 = scmp.eq.s32.totalorder %s16, 15
      %p111 = por %p109, %p110
      %p112 = scmp.ne.s32.totalorder %s103, %s104
      %p113 = scmp.eq.s32.totalorder %s16, 0
      %p114 = por %p112, %p113
      %p115 = scmp.ne.s32.totalorder %s103, %s104
      %p116 = scmp.eq.s32.totalorder %s17, 15
      %p117 = por %p115, %p116
      %p119 = scmp.ne.s32.totalorder %s104, %s118
      %p120 = scmp.eq.s32.totalorder %s17, 0
      %p121 = por %p119, %p120
      %s123 = sadd.s32 %s122, 1
      %p126 = scmp.eq.s32.totalorder %s11, 15
      %p127 = scmp.ne.s32.totalorder %s122, %s124
      %p128 = scmp.eq.s32.totalorder %s11, 0
      %p129 = por %p127, %p128
      %p130 = scmp.ne.s32.totalorder %s122, %s124
      %p131 = scmp.eq.s32.totalorder %s16, 15
      %p132 = por %p130, %p131
      %p133 = scmp.ne.s32.totalorder %s124, %s125
      %p134 = scmp.eq.s32.totalorder %s16, 0
      %p135 = por %p133, %p134
      %p136 = scmp.ne.s32.totalorder %s124, %s125
      %p137 = scmp.eq.s32.totalorder %s17, 15
      %p138 = por %p136, %p137
      %p140 = scmp.ne.s32.totalorder %s125, %s139
      %p141 = scmp.eq.s32.totalorder %s17, 0
      %p142 = por %p140, %p141
      %s143 = ssub.s32 %s18, %s30
      %s144 = ssub.s32 %s19, %s26
      %s145 = sor.u32 %s143, %s144
      %p146 = scmp.eq.s32.totalorder %s145, 0
      %s148 = sadd.s32 %s147, 1
      %s149 = scalar_select %p146, %s147, %s148
      %p152 = pneg %p146
      %p153 = scmp.eq.s32.totalorder %s11, 15
      %p154 = por %p152, %p153
      %p155 = scmp.ne.s32.totalorder %s147, %s150
      %p156 = scmp.eq.s32.totalorder %s11, 0
      %p157 = por %p155, %p156
      %p158 = scmp.ne.s32.totalorder %s147, %s150
      %p159 = scmp.eq.s32.totalorder %s16, 15
      %p160 = por %p158, %p159
      %p161 = scmp.ne.s32.totalorder %s150, %s151
      %p162 = scmp.eq.s32.totalorder %s16, 0
      %p163 = por %p161, %p162
      %p164 = scmp.ne.s32.totalorder %s150, %s151
      %p165 = scmp.eq.s32.totalorder %s17, 15
      %p166 = por %p164, %p165
      %p168 = scmp.ne.s32.totalorder %s151, %s167
      %p169 = scmp.eq.s32.totalorder %s17, 0
      %p170 = por %p168, %p169
      %p171 = scmp.le.s32.totalorder 1, %s11
      %p172 = scmp.lt.s32.totalorder %s11, 17
      %p173 = pnand %p171, %p172
      %p174 = pneg %p173
      // Predicated region
      $region9: #{perceptual_features.1} parent=5 // pred_check
        _
      $region10: #{perceptual_features.1} parent=5 // pred_check_branch
        %176 = sbr.rel (%p173) target = $region12
      $region11: #{perceptual_features.1} parent=5 // pred_region
        %s177 = ssub.s32 %s11, 1
        // Predicated region
        $region13: #{perceptual_features.1} parent=11 // pred_check
          %p178 = pneg %p72
        $region14: #{perceptual_features.1} parent=11 // pred_check_branch
          %180 = sbr.rel (%p178) target = $region16
        $region15: #{perceptual_features.1} parent=11 // pred_region
          _
        $region16: #{perceptual_features.1} parent=11 // pred_fallthru
          _
        // Predicated region
        $region17: #{perceptual_features.1} parent=11 // pred_check
          %p181 = pneg %p93
        $region18: #{perceptual_features.1} parent=11 // pred_check_branch
          %183 = sbr.rel (%p181) target = $region20
        $region19: #{perceptual_features.1} parent=11 // pred_region
          _
        $region20: #{perceptual_features.1} parent=11 // pred_fallthru
          _
        // Predicated region
        $region21: #{perceptual_features.1} parent=11 // pred_check
          %p184 = pneg %p114
        $region22: #{perceptual_features.1} parent=11 // pred_check_branch
          %186 = sbr.rel (%p184) target = $region24
        $region23: #{perceptual_features.1} parent=11 // pred_region
          _
        $region24: #{perceptual_features.1} parent=11 // pred_fallthru
          _
        // Predicated region
        $region25: #{perceptual_features.1} parent=11 // pred_check
          %p187 = pneg %p135
        $region26: #{perceptual_features.1} parent=11 // pred_check_branch
          %189 = sbr.rel (%p187) target = $region28
        $region27: #{perceptual_features.1} parent=11 // pred_region
          _
        $region28: #{perceptual_features.1} parent=11 // pred_fallthru
          _
      $region12: #{perceptual_features.1} parent=5 // pred_fallthru
        _
      %p190 = scmp.lt.s32.totalorder %s11, 16
      // Predicated region
      $region29: #{perceptual_features.1} parent=5 // pred_check
        %p191 = pneg %p190
      $region30: #{perceptual_features.1} parent=5 // pred_check_branch
        %193 = sbr.rel (%p191) target = $region32
      $region31: #{perceptual_features.1} parent=5 // pred_region
        // Predicated region
        $region33: #{perceptual_features.1} parent=31 // pred_check
          %p194 = pneg %p45
        $region34: #{perceptual_features.1} parent=31 // pred_check_branch
          %196 = sbr.rel (%p194) target = $region36
        $region35: #{perceptual_features.1} parent=31 // pred_region
          %p197 = scmp.lt.s32.totalorder %s18, 3
          %s198 = scalar_select %p197, %s18, 3
          %p199 = scmp.lt.s32.totalorder %s19, 3
          %s200 = scalar_select %p199, %s19, 3
          %s201 = smul.addr %s200, 18
          %s202 = smul.addr %s198, 72
          %s203 = sadd.s32 %s201, %s202
          %s204 = smul.addr %s203, 4
          %s205 = scalar_lea.vmem %s0, %s204
        $region36: #{perceptual_features.1} parent=31 // pred_fallthru
          _
      $region32: #{perceptual_features.1} parent=5 // pred_fallthru
        _
      %p206 = scmp.le.s32.totalorder 1, %s11
      %p207 = scmp.lt.s32.totalorder %s11, 17
      %p208 = pnand %p206, %p207
      %p209 = pneg %p208
      // Predicated region
      $region37: #{perceptual_features.1} parent=5 // pred_check
        _
      $region38: #{perceptual_features.1} parent=5 // pred_check_branch
        %211 = sbr.rel (%p208) target = $region40
      $region39: #{perceptual_features.1} parent=5 // pred_region
        %s212 = ssub.s32 %s11, 1
        %p213 = scmp.lt.s32.totalorder %s20, 3
        %s214 = scalar_select %p213, %s20, 3
        %p215 = scmp.lt.s32.totalorder %s21, 3
        %s216 = scalar_select %p215, %s21, 3
        %s217 = smul.addr %s216, 18
        %s218 = smul.addr %s214, 72
        %s219 = sadd.s32 %s217, %s218
        %s220 = smul.addr %s219, 4
        %s221 = scalar_lea.vmem %s0, %s220
        %p222 = pneg %p51
        %p223 = pneg %p48
        %p224 = pneg %p72
        %p225 = pneg %p69
        %p226 = pneg %p93
        %p227 = pneg %p90
        %p228 = pneg %p114
        %p229 = pneg %p111
        %p230 = pneg %p135
        %p231 = pneg %p132
        %p232 = pneg %p163
        %p233 = pneg %p160
        %s234 = sand.u32 %s150, 1
        %s235 = sand.u32 %s150, 1
        %s236 = smul.addr %s235, 64
        %s237 = scalar_lea.vmem [#allocation4], %s236
        %p238 = scmp.lt.s32.totalorder %s20, 3
        %s239 = scalar_select %p238, %s20, 3
        %p240 = scmp.lt.s32.totalorder %s21, 3
        %s241 = scalar_select %p240, %s21, 3
        %s242 = smul.addr %s241, 18
        %s243 = smul.addr %s239, 72
        %s244 = sadd.s32 %s242, %s243
        %s245 = smul.addr %s244, 4
        %s246 = scalar_lea.vmem %s0, %s245
        %v250 = vld [vmem:[%s1] sm:$0xf]
        %v251 = vld [vmem:[%s1 + $0x4] sm:$0xf]
        %v252 = vld [vmem:[%s1 + $0x8] sm:$0xf]
        %v253 = vld [vmem:[%s1 + $0xc] sm:$0xf]
        %v254 = vld [vmem:[%s1 + $0x10] sm:$0xf]
        %v255 = vld [vmem:[%s1 + $0x14] sm:$0xf]
        %v256 = vld [vmem:[%s1 + $0x18] sm:$0xf]
        %v257 = vld [vmem:[%s1 + $0x1c] sm:$0xf]
        %v258 = vld [vmem:[%s246] sm:$0xff]
        %v259 = vld [vmem:[%s246 + $0x8] sm:$0xff]
        %v260 = vld [vmem:[%s246 + $0x10] sm:$0xff]
        %v261 = vld [vmem:[%s246 + $0x18] sm:$0xff]
        %v262 = vld [vmem:[%s246 + $0x20] sm:$0xff]
        %v263 = vld [vmem:[%s246 + $0x28] sm:$0xff]
        %v264 = vld [vmem:[%s246 + $0x30] sm:$0xff]
        %v265 = vld [vmem:[%s246 + $0x38] sm:$0xff]
        %v266 = vld [vmem:[%s246 + $0x40] sm:$0xff]
        %v267 = vld [vmem:[%s2] sm:$0xff]
        %v268 = vld [vmem:[%s2 + $0x8] sm:$0xff]
        %v269 = vld [vmem:[%s2 + $0x10] sm:$0xff]
        %v270 = vld [vmem:[%s2 + $0x18] sm:$0xff]
        %v271 = vld [vmem:[%s2 + $0x20] sm:$0xff]
        %v272 = vld [vmem:[%s2 + $0x28] sm:$0xff]
        %v273 = vld [vmem:[%s2 + $0x30] sm:$0xff]
        %v274 = vld [vmem:[%s2 + $0x38] sm:$0xff]
        %276 = vset.pattern.permute.xlu0 0
        %277 = vperm.xlu0 %276, %v267
        %v278 = vpop.permute.xlu0 %277
        %281 = vset.pattern.permute.xlu0 0
        %282 = vperm.xlu0 %281, %v268
        %v283 = vpop.permute.xlu0 %282
        %286 = vset.pattern.permute.xlu0 0
        %287 = vperm.xlu0 %286, %v269
        %v288 = vpop.permute.xlu0 %287
        %291 = vset.pattern.permute.xlu0 0
        %292 = vperm.xlu0 %291, %v270
        %v293 = vpop.permute.xlu0 %292
        %296 = vset.pattern.permute.xlu0 0
        %297 = vperm.xlu0 %296, %v271
        %v298 = vpop.permute.xlu0 %297
        %301 = vset.pattern.permute.xlu0 0
        %302 = vperm.xlu0 %301, %v272
        %v303 = vpop.permute.xlu0 %302
        %306 = vset.pattern.permute.xlu0 0
        %307 = vperm.xlu0 %306, %v273
        %v308 = vpop.permute.xlu0 %307
        %311 = vset.pattern.permute.xlu0 0
        %312 = vperm.xlu0 %311, %v274
        %v313 = vpop.permute.xlu0 %312
        %v323 = vunpack.c.l.b16 %v250
        %v324 = vunpack.c.l.b16 %v251
        %v325 = vunpack.c.l.b16 %v252
        %v326 = vunpack.c.l.b16 %v253
        %v327 = vunpack.c.l.b16 %v254
        %v328 = vunpack.c.l.b16 %v255
        %v329 = vunpack.c.l.b16 %v256
        %v330 = vunpack.c.l.b16 %v257
        %v331 = vpack.c.b16 %v324, %v323
        %v332 = vpack.c.b16 %v326, %v325
        %v333 = vpack.c.b16 %v328, %v327
        %v334 = vpack.c.b16 %v330, %v329
        %v344 = vunpack.c.l.b16 %v258
        %v345 = vunpack.c.h.b16 %v258
        %v346 = vunpack.c.l.b16 %v259
        %v347 = vunpack.c.h.b16 %v259
        %v348 = vunpack.c.l.b16 %v260
        %v349 = vunpack.c.h.b16 %v260
        %v350 = vunpack.c.l.b16 %v261
        %v351 = vunpack.c.h.b16 %v261
        %v352 = vunpack.c.l.b16 %v262
        %v353 = vunpack.c.h.b16 %v262
        %v354 = vunpack.c.l.b16 %v263
        %v355 = vunpack.c.h.b16 %v263
        %v356 = vunpack.c.l.b16 %v264
        %v357 = vunpack.c.h.b16 %v264
        %v358 = vunpack.c.l.b16 %v265
        %v359 = vunpack.c.h.b16 %v265
        %v360 = vunpack.c.l.b16 %v266
        %v361 = vunpack.c.h.b16 %v266
        %v362 = vpack.c.b16 %v346, %v344
        %v363 = vpack.c.b16 %v347, %v345
        %v364 = vpack.c.b16 %v350, %v348
        %v365 = vpack.c.b16 %v351, %v349
        %v366 = vpack.c.b16 %v354, %v352
        %v367 = vpack.c.b16 %v355, %v353
        %v368 = vpack.c.b16 %v358, %v356
        %v369 = vpack.c.b16 %v359, %v357
        %v370 = vpack.c.b16 %v360, %v360
        %v371 = vpack.c.b16 %v361, %v361
        %vm380 = vcmask 588800
        %v382 = vsel %vm380, %v331, 0
        %v385 = vsel %vm380, %v332, 0
        %v388 = vsel %vm380, %v333, 0
        %v391 = vsel %vm380, %v334, 0
        %vm393 = vcmask 1043456
        %v395 = vsel %vm393, %v370, 0
        %v398 = vsel %vm393, %v371, 0
        %400 = vmatprep.subr.bf16.mxu0 %v363
        %401 = vmatpush1.bf16.msra.mxu0 %v362
        %402 = vmatprep.subr.bf16.mxu0 %v365
        %403 = vmatpush1.bf16.msra.mxu0 %v364
        %404 = vmatprep.subr.bf16.mxu0 %v367
        %405 = vmatpush1.bf16.msra.mxu0 %v366
        %406 = vmatprep.subr.bf16.mxu0 %v369
        %407 = vmatpush1.bf16.msra.mxu0 %v368
        %408 = vmatprep.subr.bf16.mxu0 %v398
        %409 = vmatpush1.bf16.msra.mxu0 %v395
        %410 = vmatprep.subr.bf16.mxu0 0
        %411 = vmatpush1.bf16.msra.mxu0 0
        %412 = vmatprep.subr.bf16.mxu0 0
        %413 = vmatpush1.bf16.msra.mxu0 0
        %414 = vmatprep.subr.bf16.mxu0 0
        %415 = vmatpush1.bf16.msra.mxu0 0
        %416 = vmatprep.subr.bf16.mxu0 0
        %417 = vmatpush1.bf16.msra.mxu0 0
        %418 = vmatprep.subr.bf16.mxu0 0
        %419 = vmatpush1.bf16.msra.mxu0 0
        %420 = vmatprep.subr.bf16.mxu0 0
        %421 = vmatpush1.bf16.msra.mxu0 0
        %422 = vmatprep.subr.bf16.mxu0 0
        %423 = vmatpush1.bf16.msra.mxu0 0
        %424 = vmatprep.subr.bf16.mxu0 0
        %425 = vmatpush1.bf16.msra.mxu0 0
        %426 = vmatprep.subr.bf16.mxu0 0
        %427 = vmatpush1.bf16.msra.mxu0 0
        %428 = vmatprep.subr.bf16.mxu0 0
        %429 = vmatpush1.bf16.msra.mxu0 0
        %430 = vmatprep.subr.bf16.mxu0 0
        %431 = vmatpush1.bf16.msra.mxu0 0
        %432 = vmatprep.mubr.bf16.mxu0 0
        %433 = vmatmul.mubr.bf16.gmra.mrb[0].mxu0 %v382
        %v434 = vpop.f32.mrb[0].mxu0
        %v435 = vadd.f32 %v278, %v434
        %v436 = vpop.f32.mrb[0].mxu0
        %v437 = vadd.f32 %v278, %v436
        %v438 = vpop.f32.mrb[0].mxu0
        %v439 = vadd.f32 %v283, %v438
        %v440 = vpop.f32.mrb[0].mxu0
        %v441 = vadd.f32 %v283, %v440
        %442 = vmatprep.mubr.bf16.mxu0 0
        %443 = vmatmul.mubr.bf16.gmra.mrb[0].mxu0 %v385
        %v444 = vpop.f32.mrb[0].mxu0
        %v445 = vadd.f32 %v288, %v444
        %v446 = vpop.f32.mrb[0].mxu0
        %v447 = vadd.f32 %v288, %v446
        %v448 = vpop.f32.mrb[0].mxu0
        %v449 = vadd.f32 %v293, %v448
        %v450 = vpop.f32.mrb[0].mxu0
        %v451 = vadd.f32 %v293, %v450
        %452 = vmatprep.mubr.bf16.mxu0 0
        %453 = vmatmul.mubr.bf16.gmra.mrb[0].mxu0 %v388
        %v454 = vpop.f32.mrb[0].mxu0
        %v455 = vadd.f32 %v298, %v454
        %v456 = vpop.f32.mrb[0].mxu0
        %v457 = vadd.f32 %v298, %v456
        %v458 = vpop.f32.mrb[0].mxu0
        %v459 = vadd.f32 %v303, %v458
        %v460 = vpop.f32.mrb[0].mxu0
        %v461 = vadd.f32 %v303, %v460
        %462 = vmatprep.mubr.bf16.mxu0 0
        %463 = vmatmul.mubr.bf16.gmra.mrb[0].mxu0 %v391
        %v464 = vpop.f32.mrb[0].mxu0
        %v465 = vadd.f32 %v308, %v464
        %v466 = vpop.f32.mrb[0].mxu0
        %v467 = vadd.f32 %v308, %v466
        %v468 = vpop.f32.mrb[0].mxu0
        %v469 = vadd.f32 %v313, %v468
        %v470 = vpop.f32.mrb[0].mxu0
        %v471 = vadd.f32 %v313, %v470
        %472 = vdwg.mxu0
        %v473 = vmax.f32 %v435, 0.0
        %v474 = vmax.f32 %v437, 0.0
        %v475 = vmax.f32 %v439, 0.0
        %v476 = vmax.f32 %v441, 0.0
        %v477 = vmax.f32 %v445, 0.0
        %v478 = vmax.f32 %v447, 0.0
        %v479 = vmax.f32 %v449, 0.0
        %v480 = vmax.f32 %v451, 0.0
        %v481 = vmax.f32 %v455, 0.0
        %v482 = vmax.f32 %v457, 0.0
        %v483 = vmax.f32 %v459, 0.0
        %v484 = vmax.f32 %v461, 0.0
        %v485 = vmax.f32 %v465, 0.0
        %v486 = vmax.f32 %v467, 0.0
        %v487 = vmax.f32 %v469, 0.0
        %v488 = vmax.f32 %v471, 0.0
        %v489 = vpack.c.bf16 %v475, %v473
        %v490 = vpack.c.bf16 %v476, %v474
        %v491 = vpack.c.bf16 %v479, %v477
        %v492 = vpack.c.bf16 %v480, %v478
        %v493 = vpack.c.bf16 %v483, %v481
        %v494 = vpack.c.bf16 %v484, %v482
        %v495 = vpack.c.bf16 %v487, %v485
        %v496 = vpack.c.bf16 %v488, %v486
        %505 = vrot.lane.b32.xlu0 %v489, 1
        %v506 = vpop.permute.xlu0 %505
        %507 = vrot.lane.b32.xlu0 %v490, 1
        %v508 = vpop.permute.xlu0 %507
        %509 = vrot.lane.b32.xlu0 %v491, 1
        %v510 = vpop.permute.xlu0 %509
        %511 = vrot.lane.b32.xlu0 %v492, 1
        %v512 = vpop.permute.xlu0 %511
        %513 = vrot.lane.b32.xlu0 %v493, 1
        %v514 = vpop.permute.xlu0 %513
        %515 = vrot.lane.b32.xlu0 %v494, 1
        %v516 = vpop.permute.xlu0 %515
        %517 = vrot.lane.b32.xlu0 %v495, 1
        %v518 = vpop.permute.xlu0 %517
        %519 = vrot.lane.b32.xlu0 %v496, 1
        %v520 = vpop.permute.xlu0 %519
        %vm521 = vcmask 7168
        %v522 = vsel %vm521, %v506, %v508
        %v523 = vsel %vm521, %v510, %v512
        %v524 = vsel %vm521, %v514, %v516
        %v525 = vsel %vm521, %v518, %v520
        %vm534 = vcmask 1047560
        %535 = vst.msk [vmem:[#allocation2] sm:$0xff] %vm534, %v506
        %vm536 = vcmask 269312
        %537 = vst.msk [vmem:[#allocation2 + $0x8] sm:$0xff] %vm536, %v522
        %538 = vst.msk [vmem:[#allocation2 + $0x10] sm:$0xff] %vm534, %v510
        %539 = vst.msk [vmem:[#allocation2 + $0x18] sm:$0xff] %vm536, %v523
        %540 = vst.msk [vmem:[#allocation2 + $0x20] sm:$0xff] %vm534, %v514
        %541 = vst.msk [vmem:[#allocation2 + $0x28] sm:$0xff] %vm536, %v524
        %542 = vst.msk [vmem:[#allocation2 + $0x30] sm:$0xff] %vm534, %v518
        %543 = vst.msk [vmem:[#allocation2 + $0x38] sm:$0xff] %vm536, %v525
        %p544 = scmp.eq.s32.totalorder %s21, 0
        // Predicated region
        $region41: #{perceptual_features.1} parent=39 // pred_check
          %p545 = pneg %p544
        $region42: #{perceptual_features.1} parent=39 // pred_check_branch
          %547 = sbr.rel (%p545) target = $region44
        $region43: #{perceptual_features.1} parent=39 // pred_region
          %vm548 = vcmask 138248
          %549 = vst.msk [vmem:[#allocation2] sm:$0xff] %vm548, 0
          %550 = vst.msk [vmem:[#allocation2 + $0x10] sm:$0xff] %vm548, 0
          %551 = vst.msk [vmem:[#allocation2 + $0x20] sm:$0xff] %vm548, 0
          %552 = vst.msk [vmem:[#allocation2 + $0x30] sm:$0xff] %vm548, 0
        $region44: #{perceptual_features.1} parent=39 // pred_fallthru
          _
        %p553 = scmp.eq.s32.totalorder %s21, 3
        // Predicated region
        $region45: #{perceptual_features.1} parent=39 // pred_check
          %p554 = pneg %p553
        $region46: #{perceptual_features.1} parent=39 // pred_check_branch
          %556 = sbr.rel (%p554) target = $region48
        $region47: #{perceptual_features.1} parent=39 // pred_region
          %vm557 = vcmask 269448
          %558 = vst.msk [vmem:[#allocation2 + $0x8] sm:$0xff] %vm557, 0
          %559 = vst.msk [vmem:[#allocation2 + $0x18] sm:$0xff] %vm557, 0
          %560 = vst.msk [vmem:[#allocation2 + $0x28] sm:$0xff] %vm557, 0
          %561 = vst.msk [vmem:[#allocation2 + $0x38] sm:$0xff] %vm557, 0
        $region48: #{perceptual_features.1} parent=39 // pred_fallthru
          _
        %v562 = vlaneseq
        %v563 = vand.u32 %v562, 127
        %vm564 = vcmp.lt.s32.totalorder %v563, 0
        %v565 = vsub.s32 0, %v563
        %v566 = vsel %vm564, %v565, %v563
        %v567 = vshrl.u32 %v566, 4
        %v568 = vand.u32 %v566, 15
        %v569 = vsub.s32 0, %v568
        %v570 = vsel %vm564, %v569, %v568
        %vm571 = vcmp.ne.s32.totalorder %v570, 0
        %vm572 = vcmp.lt.s32.totalorder %v570, 0
        %vm573 = vmand %vm572, %vm571
        %v574 = vadd.s32 %v570, 16
        %v575 = vsel %vm573, %v574, %v570
        %vm576 = vcmp.eq.s32.totalorder %v575, 0
        %vm577 = vcmp.eq.s32.totalorder %v575, 15
        %v578 = vld [vmem:[#allocation2] sm:$0xff]
        %v579 = vld [vmem:[#allocation2 + $0x10] sm:$0xff]
        %v580 = vld [vmem:[#allocation2 + $0x20] sm:$0xff]
        %v581 = vld [vmem:[#allocation2 + $0x30] sm:$0xff]
        %v582 = vsel %vm576, 1, 0
        %vm583 = vcmp.eq.s32.totalorder %v582, 1
        %vm584 = vmpackc.low %vm583, %vm583
        %v585 = vsel %vm584, 65537, 0
        %v586 = vlaneseq
        %v587 = vshrl.u32 %v586, 7
        %v588 = vsub.s32 0, %v587
        %v589 = vrot.slane %v585, %v588
        %vm590 = vcmp.ne.s16.totalorder %v589, 0
        %v591 = vsel %vm590, 0, %v578
        %v592 = vsel %vm590, 0, %v579
        %v593 = vsel %vm590, 0, %v580
        %v594 = vsel %vm590, 0, %v581
        %595 = vst [vmem:[#allocation3] sm:$0xff] %v591
        %596 = vst [vmem:[#allocation3 + $0x8] sm:$0xff] %v592
        %597 = vst [vmem:[#allocation3 + $0x10] sm:$0xff] %v593
        %598 = vst [vmem:[#allocation3 + $0x18] sm:$0xff] %v594
        %v599 = vld [vmem:[#allocation2] sm:$0xff]
        %v600 = vld [vmem:[#allocation2 + $0x8] sm:$0xff]
        %v601 = vld [vmem:[#allocation2 + $0x10] sm:$0xff]
        %v602 = vld [vmem:[#allocation2 + $0x18] sm:$0xff]
        %v603 = vld [vmem:[#allocation2 + $0x20] sm:$0xff]
        %v604 = vld [vmem:[#allocation2 + $0x28] sm:$0xff]
        %v605 = vld [vmem:[#allocation2 + $0x30] sm:$0xff]
        %v606 = vld [vmem:[#allocation2 + $0x38] sm:$0xff]
        %615 = vrot.lane.b32.xlu0 %v599, 127
        %v616 = vpop.permute.xlu0 %615
        %617 = vrot.lane.b32.xlu0 %v600, 127
        %v618 = vpop.permute.xlu0 %617
        %619 = vrot.lane.b32.xlu0 %v601, 127
        %v620 = vpop.permute.xlu0 %619
        %621 = vrot.lane.b32.xlu0 %v602, 127
        %v622 = vpop.permute.xlu0 %621
        %623 = vrot.lane.b32.xlu0 %v603, 127
        %v624 = vpop.permute.xlu0 %623
        %625 = vrot.lane.b32.xlu0 %v604, 127
        %v626 = vpop.permute.xlu0 %625
        %627 = vrot.lane.b32.xlu0 %v605, 127
        %v628 = vpop.permute.xlu0 %627
        %629 = vrot.lane.b32.xlu0 %v606, 127
        %v630 = vpop.permute.xlu0 %629
        %vm631 = vcmask 1039360
        %v632 = vsel %vm631, %v616, %v618
        %v633 = vsel %vm631, %v620, %v622
        %v634 = vsel %vm631, %v624, %v626
        %v635 = vsel %vm631, %v628, %v630
        %640 = vst [vmem:[#allocation3 + $0x20] sm:$0xff] %v632
        %641 = vst [vmem:[#allocation3 + $0x28] sm:$0xff] %v633
        %642 = vst [vmem:[#allocation3 + $0x30] sm:$0xff] %v634
        %643 = vst [vmem:[#allocation3 + $0x38] sm:$0xff] %v635
        %v644 = vld [vmem:[#allocation2] sm:$0xff]
        %v645 = vld [vmem:[#allocation2 + $0x8] sm:$0xff]
        %v646 = vld [vmem:[#allocation2 + $0x10] sm:$0xff]
        %v647 = vld [vmem:[#allocation2 + $0x18] sm:$0xff]
        %v648 = vld [vmem:[#allocation2 + $0x20] sm:$0xff]
        %v649 = vld [vmem:[#allocation2 + $0x28] sm:$0xff]
        %v650 = vld [vmem:[#allocation2 + $0x30] sm:$0xff]
        %v651 = vld [vmem:[#allocation2 + $0x38] sm:$0xff]
        %v652 = vsel %vm577, 1, 0
        %vm653 = vcmp.eq.s32.totalorder %v652, 1
        %vm654 = vmpackc.low %vm653, %vm653
        %v655 = vsel %vm654, 65537, 0
        %v656 = vlaneseq
        %v657 = vshrl.u32 %v656, 7
        %v658 = vsub.s32 0, %v657
        %v659 = vrot.slane %v655, %v658
        %660 = vrot.lane.b32.xlu0 %v659, 2
        %v661 = vpop.permute.xlu0 %660
        %vm662 = vcmp.ne.s16.totalorder %v661, 0
        %v663 = vsel %vm662, 0, %v644
        %v664 = vsel %vm662, 0, %v645
        %v665 = vsel %vm662, 0, %v646
        %v666 = vsel %vm662, 0, %v647
        %v667 = vsel %vm662, 0, %v648
        %v668 = vsel %vm662, 0, %v649
        %v669 = vsel %vm662, 0, %v650
        %v670 = vsel %vm662, 0, %v651
        %679 = vrot.lane.b32.xlu0 %v663, 126
        %v680 = vpop.permute.xlu0 %679
        %681 = vrot.lane.b32.xlu0 %v664, 126
        %v682 = vpop.permute.xlu0 %681
        %683 = vrot.lane.b32.xlu0 %v665, 126
        %v684 = vpop.permute.xlu0 %683
        %685 = vrot.lane.b32.xlu0 %v666, 126
        %v686 = vpop.permute.xlu0 %685
        %687 = vrot.lane.b32.xlu0 %v667, 126
        %v688 = vpop.permute.xlu0 %687
        %689 = vrot.lane.b32.xlu0 %v668, 126
        %v690 = vpop.permute.xlu0 %689
        %691 = vrot.lane.b32.xlu0 %v669, 126
        %v692 = vpop.permute.xlu0 %691
        %693 = vrot.lane.b32.xlu0 %v670, 126
        %v694 = vpop.permute.xlu0 %693
        %vm695 = vcmask 1031168
        %v696 = vsel %vm695, %v680, %v682
        %v697 = vsel %vm695, %v684, %v686
        %v698 = vsel %vm695, %v688, %v690
        %v699 = vsel %vm695, %v692, %v694
        %704 = vst [vmem:[#allocation3 + $0x40] sm:$0xff] %v696
        %705 = vst [vmem:[#allocation3 + $0x48] sm:$0xff] %v697
        %706 = vst [vmem:[#allocation3 + $0x50] sm:$0xff] %v698
        %707 = vst [vmem:[#allocation3 + $0x58] sm:$0xff] %v699
        %v708 = vld [vmem:[#allocation2] sm:$0xff]
        %v709 = vld [vmem:[#allocation2 + $0x8] sm:$0xff]
        %v710 = vld [vmem:[#allocation2 + $0x10] sm:$0xff]
        %v711 = vld [vmem:[#allocation2 + $0x18] sm:$0xff]
        %v712 = vld [vmem:[#allocation2 + $0x20] sm:$0xff]
        %v713 = vld [vmem:[#allocation2 + $0x28] sm:$0xff]
        %v714 = vld [vmem:[#allocation2 + $0x30] sm:$0xff]
        %v715 = vld [vmem:[#allocation2 + $0x38] sm:$0xff]
        %716 = vrot.lane.b32.xlu0 %v589, 16
        %v717 = vpop.permute.xlu0 %716
        %vm718 = vcmp.ne.s16.totalorder %v717, 0
        %v719 = vsel %vm718, 0, %v708
        %v720 = vsel %vm718, 0, %v709
        %v721 = vsel %vm718, 0, %v710
        %v722 = vsel %vm718, 0, %v711
        %v723 = vsel %vm718, 0, %v712
        %v724 = vsel %vm718, 0, %v713
        %v725 = vsel %vm718, 0, %v714
        %v726 = vsel %vm718, 0, %v715
        %735 = vrot.lane.b32.xlu0 %v719, 112
        %v736 = vpop.permute.xlu0 %735
        %737 = vrot.lane.b32.xlu0 %v720, 112
        %v738 = vpop.permute.xlu0 %737
        %739 = vrot.lane.b32.xlu0 %v721, 112
        %v740 = vpop.permute.xlu0 %739
        %741 = vrot.lane.b32.xlu0 %v722, 112
        %v742 = vpop.permute.xlu0 %741
        %743 = vrot.lane.b32.xlu0 %v723, 112
        %v744 = vpop.permute.xlu0 %743
        %745 = vrot.lane.b32.xlu0 %v724, 112
        %v746 = vpop.permute.xlu0 %745
        %747 = vrot.lane.b32.xlu0 %v725, 112
        %v748 = vpop.permute.xlu0 %747
        %749 = vrot.lane.b32.xlu0 %v726, 112
        %v750 = vpop.permute.xlu0 %749
        %vm751 = vcmask 916480
        %v752 = vsel %vm751, %v736, %v738
        %v753 = vsel %vm751, %v740, %v742
        %v754 = vsel %vm751, %v744, %v746
        %v755 = vsel %vm751, %v748, %v750
        %760 = vst [vmem:[#allocation3 + $0x60] sm:$0xff] %v752
        %761 = vst [vmem:[#allocation3 + $0x68] sm:$0xff] %v753
        %762 = vst [vmem:[#allocation3 + $0x70] sm:$0xff] %v754
        %763 = vst [vmem:[#allocation3 + $0x78] sm:$0xff] %v755
        %v764 = vld [vmem:[#allocation2] sm:$0xff]
        %v765 = vld [vmem:[#allocation2 + $0x8] sm:$0xff]
        %v766 = vld [vmem:[#allocation2 + $0x10] sm:$0xff]
        %v767 = vld [vmem:[#allocation2 + $0x18] sm:$0xff]
        %v768 = vld [vmem:[#allocation2 + $0x20] sm:$0xff]
        %v769 = vld [vmem:[#allocation2 + $0x28] sm:$0xff]
        %v770 = vld [vmem:[#allocation2 + $0x30] sm:$0xff]
        %v771 = vld [vmem:[#allocation2 + $0x38] sm:$0xff]
        %780 = vrot.lane.b32.xlu0 %v764, 111
        %v781 = vpop.permute.xlu0 %780
        %782 = vrot.lane.b32.xlu0 %v765, 111
        %v783 = vpop.permute.xlu0 %782
        %784 = vrot.lane.b32.xlu0 %v766, 111
        %v785 = vpop.permute.xlu0 %784
        %786 = vrot.lane.b32.xlu0 %v767, 111
        %v787 = vpop.permute.xlu0 %786
        %788 = vrot.lane.b32.xlu0 %v768, 111
        %v789 = vpop.permute.xlu0 %788
        %790 = vrot.lane.b32.xlu0 %v769, 111
        %v791 = vpop.permute.xlu0 %790
        %792 = vrot.lane.b32.xlu0 %v770, 111
        %v793 = vpop.permute.xlu0 %792
        %794 = vrot.lane.b32.xlu0 %v771, 111
        %v795 = vpop.permute.xlu0 %794
        %vm796 = vcmask 908288
        %v797 = vsel %vm796, %v781, %v783
        %v798 = vsel %vm796, %v785, %v787
        %v799 = vsel %vm796, %v789, %v791
        %v800 = vsel %vm796, %v793, %v795
        %805 = vst [vmem:[#allocation3 + $0x80] sm:$0xff] %v797
        %806 = vst [vmem:[#allocation3 + $0x88] sm:$0xff] %v798
        %807 = vst [vmem:[#allocation3 + $0x90] sm:$0xff] %v799
        %808 = vst [vmem:[#allocation3 + $0x98] sm:$0xff] %v800
        %v809 = vld [vmem:[#allocation2] sm:$0xff]
        %v810 = vld [vmem:[#allocation2 + $0x8] sm:$0xff]
        %v811 = vld [vmem:[#allocation2 + $0x10] sm:$0xff]
        %v812 = vld [vmem:[#allocation2 + $0x18] sm:$0xff]
        %v813 = vld [vmem:[#allocation2 + $0x20] sm:$0xff]
        %v814 = vld [vmem:[#allocation2 + $0x28] sm:$0xff]
        %v815 = vld [vmem:[#allocation2 + $0x30] sm:$0xff]
        %v816 = vld [vmem:[#allocation2 + $0x38] sm:$0xff]
        %817 = vrot.lane.b32.xlu0 %v659, 18
        %v818 = vpop.permute.xlu0 %817
        %vm819 = vcmp.ne.s16.totalorder %v818, 0
        %v820 = vsel %vm819, 0, %v809
        %v821 = vsel %vm819, 0, %v810
        %v822 = vsel %vm819, 0, %v811
        %v823 = vsel %vm819, 0, %v812
        %v824 = vsel %vm819, 0, %v813
        %v825 = vsel %vm819, 0, %v814
        %v826 = vsel %vm819, 0, %v815
        %v827 = vsel %vm819, 0, %v816
        %836 = vrot.lane.b32.xlu0 %v820, 110
        %v837 = vpop.permute.xlu0 %836
        %838 = vrot.lane.b32.xlu0 %v821, 110
        %v839 = vpop.permute.xlu0 %838
        %840 = vrot.lane.b32.xlu0 %v822, 110
        %v841 = vpop.permute.xlu0 %840
        %842 = vrot.lane.b32.xlu0 %v823, 110
        %v843 = vpop.permute.xlu0 %842
        %844 = vrot.lane.b32.xlu0 %v824, 110
        %v845 = vpop.permute.xlu0 %844
        %846 = vrot.lane.b32.xlu0 %v825, 110
        %v847 = vpop.permute.xlu0 %846
        %848 = vrot.lane.b32.xlu0 %v826, 110
        %v849 = vpop.permute.xlu0 %848
        %850 = vrot.lane.b32.xlu0 %v827, 110
        %v851 = vpop.permute.xlu0 %850
        %vm852 = vcmask 900096
        %v853 = vsel %vm852, %v837, %v839
        %v854 = vsel %vm852, %v841, %v843
        %v855 = vsel %vm852, %v845, %v847
        %v856 = vsel %vm852, %v849, %v851
        %861 = vst [vmem:[#allocation3 + $0xa0] sm:$0xff] %v853
        %862 = vst [vmem:[#allocation3 + $0xa8] sm:$0xff] %v854
        %863 = vst [vmem:[#allocation3 + $0xb0] sm:$0xff] %v855
        %864 = vst [vmem:[#allocation3 + $0xb8] sm:$0xff] %v856
        %v865 = vld [vmem:[#allocation2] sm:$0xff]
        %v866 = vld [vmem:[#allocation2 + $0x8] sm:$0xff]
        %v867 = vld [vmem:[#allocation2 + $0x10] sm:$0xff]
        %v868 = vld [vmem:[#allocation2 + $0x18] sm:$0xff]
        %v869 = vld [vmem:[#allocation2 + $0x20] sm:$0xff]
        %v870 = vld [vmem:[#allocation2 + $0x28] sm:$0xff]
        %v871 = vld [vmem:[#allocation2 + $0x30] sm:$0xff]
        %v872 = vld [vmem:[#allocation2 + $0x38] sm:$0xff]
        %873 = vrot.lane.b32.xlu0 %v589, 32
        %v874 = vpop.permute.xlu0 %873
        %vm875 = vcmp.ne.s16.totalorder %v874, 0
        %v876 = vsel %vm875, 0, %v865
        %v877 = vsel %vm875, 0, %v866
        %v878 = vsel %vm875, 0, %v867
        %v879 = vsel %vm875, 0, %v868
        %v880 = vsel %vm875, 0, %v869
        %v881 = vsel %vm875, 0, %v870
        %v882 = vsel %vm875, 0, %v871
        %v883 = vsel %vm875, 0, %v872
        %892 = vrot.lane.b32.xlu0 %v876, 96
        %v893 = vpop.permute.xlu0 %892
        %894 = vrot.lane.b32.xlu0 %v877, 96
        %v895 = vpop.permute.xlu0 %894
        %896 = vrot.lane.b32.xlu0 %v878, 96
        %v897 = vpop.permute.xlu0 %896
        %898 = vrot.lane.b32.xlu0 %v879, 96
        %v899 = vpop.permute.xlu0 %898
        %900 = vrot.lane.b32.xlu0 %v880, 96
        %v901 = vpop.permute.xlu0 %900
        %902 = vrot.lane.b32.xlu0 %v881, 96
        %v903 = vpop.permute.xlu0 %902
        %904 = vrot.lane.b32.xlu0 %v882, 96
        %v905 = vpop.permute.xlu0 %904
        %906 = vrot.lane.b32.xlu0 %v883, 96
        %v907 = vpop.permute.xlu0 %906
        %vm908 = vcmask 785408
        %v909 = vsel %vm908, %v893, %v895
        %v910 = vsel %vm908, %v897, %v899
        %v911 = vsel %vm908, %v901, %v903
        %v912 = vsel %vm908, %v905, %v907
        %917 = vst [vmem:[#allocation3 + $0xc0] sm:$0xff] %v909
        %918 = vst [vmem:[#allocation3 + $0xc8] sm:$0xff] %v910
        %919 = vst [vmem:[#allocation3 + $0xd0] sm:$0xff] %v911
        %920 = vst [vmem:[#allocation3 + $0xd8] sm:$0xff] %v912
        %v921 = vld [vmem:[#allocation2] sm:$0xff]
        %v922 = vld [vmem:[#allocation2 + $0x8] sm:$0xff]
        %v923 = vld [vmem:[#allocation2 + $0x10] sm:$0xff]
        %v924 = vld [vmem:[#allocation2 + $0x18] sm:$0xff]
        %v925 = vld [vmem:[#allocation2 + $0x20] sm:$0xff]
        %v926 = vld [vmem:[#allocation2 + $0x28] sm:$0xff]
        %v927 = vld [vmem:[#allocation2 + $0x30] sm:$0xff]
        %v928 = vld [vmem:[#allocation2 + $0x38] sm:$0xff]
        %937 = vrot.lane.b32.xlu0 %v921, 95
        %v938 = vpop.permute.xlu0 %937
        %939 = vrot.lane.b32.xlu0 %v922, 95
        %v940 = vpop.permute.xlu0 %939
        %941 = vrot.lane.b32.xlu0 %v923, 95
        %v942 = vpop.permute.xlu0 %941
        %943 = vrot.lane.b32.xlu0 %v924, 95
        %v944 = vpop.permute.xlu0 %943
        %945 = vrot.lane.b32.xlu0 %v925, 95
        %v946 = vpop.permute.xlu0 %945
        %947 = vrot.lane.b32.xlu0 %v926, 95
        %v948 = vpop.permute.xlu0 %947
        %949 = vrot.lane.b32.xlu0 %v927, 95
        %v950 = vpop.permute.xlu0 %949
        %951 = vrot.lane.b32.xlu0 %v928, 95
        %v952 = vpop.permute.xlu0 %951
        %vm953 = vcmask 777216
        %v954 = vsel %vm953, %v938, %v940
        %v955 = vsel %vm953, %v942, %v944
        %v956 = vsel %vm953, %v946, %v948
        %v957 = vsel %vm953, %v950, %v952
        %962 = vst [vmem:[#allocation3 + $0xe0] sm:$0xff] %v954
        %963 = vst [vmem:[#allocation3 + $0xe8] sm:$0xff] %v955
        %964 = vst [vmem:[#allocation3 + $0xf0] sm:$0xff] %v956
        %965 = vst [vmem:[#allocation3 + $0xf8] sm:$0xff] %v957
        %v966 = vld [vmem:[#allocation2] sm:$0xff]
        %v967 = vld [vmem:[#allocation2 + $0x8] sm:$0xff]
        %v968 = vld [vmem:[#allocation2 + $0x10] sm:$0xff]
        %v969 = vld [vmem:[#allocation2 + $0x18] sm:$0xff]
        %v970 = vld [vmem:[#allocation2 + $0x20] sm:$0xff]
        %v971 = vld [vmem:[#allocation2 + $0x28] sm:$0xff]
        %v972 = vld [vmem:[#allocation2 + $0x30] sm:$0xff]
        %v973 = vld [vmem:[#allocation2 + $0x38] sm:$0xff]
        %974 = vrot.lane.b32.xlu0 %v659, 34
        %v975 = vpop.permute.xlu0 %974
        %vm976 = vcmp.ne.s16.totalorder %v975, 0
        %v977 = vsel %vm976, 0, %v966
        %v978 = vsel %vm976, 0, %v967
        %v979 = vsel %vm976, 0, %v968
        %v980 = vsel %vm976, 0, %v969
        %v981 = vsel %vm976, 0, %v970
        %v982 = vsel %vm976, 0, %v971
        %v983 = vsel %vm976, 0, %v972
        %v984 = vsel %vm976, 0, %v973
        %993 = vrot.lane.b32.xlu0 %v977, 94
        %v994 = vpop.permute.xlu0 %993
        %995 = vrot.lane.b32.xlu0 %v978, 94
        %v996 = vpop.permute.xlu0 %995
        %997 = vrot.lane.b32.xlu0 %v979, 94
        %v998 = vpop.permute.xlu0 %997
        %999 = vrot.lane.b32.xlu0 %v980, 94
        %v1000 = vpop.permute.xlu0 %999
        %1001 = vrot.lane.b32.xlu0 %v981, 94
        %v1002 = vpop.permute.xlu0 %1001
        %1003 = vrot.lane.b32.xlu0 %v982, 94
        %v1004 = vpop.permute.xlu0 %1003
        %1005 = vrot.lane.b32.xlu0 %v983, 94
        %v1006 = vpop.permute.xlu0 %1005
        %1007 = vrot.lane.b32.xlu0 %v984, 94
        %v1008 = vpop.permute.xlu0 %1007
        %vm1009 = vcmask 769024
        %v1010 = vsel %vm1009, %v994, %v996
        %v1011 = vsel %vm1009, %v998, %v1000
        %v1012 = vsel %vm1009, %v1002, %v1004
        %v1013 = vsel %vm1009, %v1006, %v1008
        %1018 = vst [vmem:[#allocation3 + $0x100] sm:$0xff] %v1010
        %1019 = vst [vmem:[#allocation3 + $0x108] sm:$0xff] %v1011
        %1020 = vst [vmem:[#allocation3 + $0x110] sm:$0xff] %v1012
        %1021 = vst [vmem:[#allocation3 + $0x118] sm:$0xff] %v1013
        %v1022 = vld [vmem:[%s3] sm:$0xff]
        %v1023 = vld [vmem:[%s3 + $0x8] sm:$0xff]
        %v1024 = vld [vmem:[%s3 + $0x10] sm:$0xf]
        %v1025 = vld [vmem:[%s3 + $0x14] sm:$0xff]
        %v1026 = vld [vmem:[%s3 + $0x1c] sm:$0xff]
        %v1027 = vld [vmem:[%s3 + $0x24] sm:$0xf]
        %v1028 = vld [vmem:[%s3 + $0x28] sm:$0xff]
        %v1029 = vld [vmem:[%s3 + $0x30] sm:$0xff]
        %v1030 = vld [vmem:[%s3 + $0x38] sm:$0xf]
        %v1031 = vld [vmem:[%s3 + $0x3c] sm:$0xff]
        %v1032 = vld [vmem:[%s3 + $0x44] sm:$0xff]
        %v1033 = vld [vmem:[%s3 + $0x4c] sm:$0xf]
        %v1034 = vld [vmem:[%s3 + $0x50] sm:$0xff]
        %v1035 = vld [vmem:[%s3 + $0x58] sm:$0xff]
        %v1036 = vld [vmem:[%s3 + $0x60] sm:$0xf]
        %v1037 = vld [vmem:[%s3 + $0x64] sm:$0xff]
        %v1038 = vld [vmem:[%s3 + $0x6c] sm:$0xff]
        %v1039 = vld [vmem:[%s3 + $0x74] sm:$0xf]
        %v1040 = vld [vmem:[%s3 + $0x78] sm:$0xff]
        %v1041 = vld [vmem:[%s3 + $0x80] sm:$0xff]
        %v1042 = vld [vmem:[%s3 + $0x88] sm:$0xf]
        %v1043 = vld [vmem:[%s3 + $0x8c] sm:$0xff]
        %v1044 = vld [vmem:[%s3 + $0x94] sm:$0xff]
        %v1045 = vld [vmem:[%s3 + $0x9c] sm:$0xf]
        %v1046 = vld [vmem:[#allocation3] sm:$0xff]
        %v1047 = vld [vmem:[#allocation3 + $0x8] sm:$0xff]
        %v1048 = vld [vmem:[#allocation3 + $0x10] sm:$0xff]
        %v1049 = vld [vmem:[#allocation3 + $0x18] sm:$0xff]
        %v1050 = vld [vmem:[#allocation3 + $0x20] sm:$0xff]
        %v1051 = vld [vmem:[#allocation3 + $0x28] sm:$0xff]
        %v1052 = vld [vmem:[#allocation3 + $0x30] sm:$0xff]
        %v1053 = vld [vmem:[#allocation3 + $0x38] sm:$0xff]
        %v1054 = vld [vmem:[#allocation3 + $0x40] sm:$0xff]
        %v1055 = vld [vmem:[#allocation3 + $0x48] sm:$0xff]
        %v1056 = vld [vmem:[#allocation3 + $0x50] sm:$0xff]
        %v1057 = vld [vmem:[#allocation3 + $0x58] sm:$0xff]
        %v1058 = vld [vmem:[#allocation3 + $0x60] sm:$0xff]
        %v1059 = vld [vmem:[#allocation3 + $0x68] sm:$0xff]
        %v1060 = vld [vmem:[#allocation3 + $0x70] sm:$0xff]
        %v1061 = vld [vmem:[#allocation3 + $0x78] sm:$0xff]
        %v1062 = vld [vmem:[#allocation3 + $0x80] sm:$0xff]
        %v1063 = vld [vmem:[#allocation3 + $0x88] sm:$0xff]
        %v1064 = vld [vmem:[#allocation3 + $0x90] sm:$0xff]
        %v1065 = vld [vmem:[#allocation3 + $0x98] sm:$0xff]
        %v1066 = vld [vmem:[#allocation3 + $0xa0] sm:$0xff]
        %v1067 = vld [vmem:[#allocation3 + $0xa8] sm:$0xff]
        %v1068 = vld [vmem:[#allocation3 + $0xb0] sm:$0xff]
        %v1069 = vld [vmem:[#allocation3 + $0xb8] sm:$0xff]
        %v1070 = vld [vmem:[#allocation3 + $0xc0] sm:$0xff]
        %v1071 = vld [vmem:[#allocation3 + $0xc8] sm:$0xff]
        %v1072 = vld [vmem:[#allocation3 + $0xd0] sm:$0xff]
        %v1073 = vld [vmem:[#allocation3 + $0xd8] sm:$0xff]
        %v1074 = vld [vmem:[#allocation3 + $0xe0] sm:$0xff]
        %v1075 = vld [vmem:[#allocation3 + $0xe8] sm:$0xff]
        %v1076 = vld [vmem:[#allocation3 + $0xf0] sm:$0xff]
        %v1077 = vld [vmem:[#allocation3 + $0xf8] sm:$0xff]
        %v1078 = vld [vmem:[#allocation3 + $0x100] sm:$0xff]
        %v1079 = vld [vmem:[#allocation3 + $0x108] sm:$0xff]
        %v1080 = vld [vmem:[#allocation3 + $0x110] sm:$0xff]
        %v1081 = vld [vmem:[#allocation3 + $0x118] sm:$0xff]
        %v1082 = vld [vmem:[%s4] sm:$0xff]
        %v1083 = vld [vmem:[%s4 + $0x8] sm:$0xff]
        %v1084 = vld [vmem:[%s4 + $0x10] sm:$0xff]
        %v1085 = vld [vmem:[%s4 + $0x18] sm:$0xff]
        %v1086 = vld [vmem:[%s4 + $0x20] sm:$0xff]
        %v1087 = vld [vmem:[%s4 + $0x28] sm:$0xff]
        %v1088 = vld [vmem:[%s4 + $0x30] sm:$0xff]
        %v1089 = vld [vmem:[%s4 + $0x38] sm:$0xff]
        %1091 = vset.pattern.permute.xlu0 0
        %1092 = vperm.xlu0 %1091, %v1082
        %v1093 = vpop.permute.xlu0 %1092
        %1096 = vset.pattern.permute.xlu0 0
        %1097 = vperm.xlu0 %1096, %v1083
        %v1098 = vpop.permute.xlu0 %1097
        %1101 = vset.pattern.permute.xlu0 0
        %1102 = vperm.xlu0 %1101, %v1084
        %v1103 = vpop.permute.xlu0 %1102
        %1106 = vset.pattern.permute.xlu0 0
        %1107 = vperm.xlu0 %1106, %v1085
        %v1108 = vpop.permute.xlu0 %1107
        %1111 = vset.pattern.permute.xlu0 0
        %1112 = vperm.xlu0 %1111, %v1086
        %v1113 = vpop.permute.xlu0 %1112
        %1116 = vset.pattern.permute.xlu0 0
        %1117 = vperm.xlu0 %1116, %v1087
        %v1118 = vpop.permute.xlu0 %1117
        %1121 = vset.pattern.permute.xlu0 0
        %1122 = vperm.xlu0 %1121, %v1088
        %v1123 = vpop.permute.xlu0 %1122
        %1126 = vset.pattern.permute.xlu0 0
        %1127 = vperm.xlu0 %1126, %v1089
        %v1128 = vpop.permute.xlu0 %1127
        %v1154 = vunpack.c.l.b16 %v1022
        %v1155 = vunpack.c.h.b16 %v1022
        %v1156 = vunpack.c.l.b16 %v1023
        %v1157 = vunpack.c.h.b16 %v1023
        %v1158 = vunpack.c.l.b16 %v1024
        %v1159 = vunpack.c.l.b16 %v1025
        %v1160 = vunpack.c.h.b16 %v1025
        %v1161 = vunpack.c.l.b16 %v1026
        %v1162 = vunpack.c.h.b16 %v1026
        %v1163 = vunpack.c.l.b16 %v1027
        %v1164 = vunpack.c.l.b16 %v1028
        %v1165 = vunpack.c.h.b16 %v1028
        %v1166 = vunpack.c.l.b16 %v1029
        %v1167 = vunpack.c.h.b16 %v1029
        %v1168 = vunpack.c.l.b16 %v1030
        %v1169 = vunpack.c.l.b16 %v1031
        %v1170 = vunpack.c.h.b16 %v1031
        %v1171 = vunpack.c.l.b16 %v1032
        %v1172 = vunpack.c.h.b16 %v1032
        %v1173 = vunpack.c.l.b16 %v1033
        %v1174 = vunpack.c.l.b16 %v1034
        %v1175 = vunpack.c.h.b16 %v1034
        %v1176 = vunpack.c.l.b16 %v1035
        %v1177 = vunpack.c.h.b16 %v1035
        %v1178 = vunpack.c.l.b16 %v1036
        %v1179 = vunpack.c.l.b16 %v1037
        %v1180 = vunpack.c.h.b16 %v1037
        %v1181 = vunpack.c.l.b16 %v1038
        %v1182 = vunpack.c.h.b16 %v1038
        %v1183 = vunpack.c.l.b16 %v1039
        %v1184 = vunpack.c.l.b16 %v1040
        %v1185 = vunpack.c.h.b16 %v1040
        %v1186 = vunpack.c.l.b16 %v1041
        %v1187 = vunpack.c.h.b16 %v1041
        %v1188 = vunpack.c.l.b16 %v1042
        %v1189 = vunpack.c.l.b16 %v1043
        %v1190 = vunpack.c.h.b16 %v1043
        %v1191 = vunpack.c.l.b16 %v1044
        %v1192 = vunpack.c.h.b16 %v1044
        %v1193 = vunpack.c.l.b16 %v1045
        %v1194 = vpack.c.b16 %v1159, %v1154
        %v1195 = vpack.c.b16 %v1160, %v1155
        %v1196 = vpack.c.b16 %v1161, %v1156
        %v1197 = vpack.c.b16 %v1162, %v1157
        %v1198 = vpack.c.b16 %v1163, %v1158
        %v1199 = vpack.c.b16 %v1169, %v1164
        %v1200 = vpack.c.b16 %v1170, %v1165
        %v1201 = vpack.c.b16 %v1171, %v1166
        %v1202 = vpack.c.b16 %v1172, %v1167
        %v1203 = vpack.c.b16 %v1173, %v1168
        %v1204 = vpack.c.b16 %v1179, %v1174
        %v1205 = vpack.c.b16 %v1180, %v1175
        %v1206 = vpack.c.b16 %v1181, %v1176
        %v1207 = vpack.c.b16 %v1182, %v1177
        %v1208 = vpack.c.b16 %v1183, %v1178
        %v1209 = vpack.c.b16 %v1189, %v1184
        %v1210 = vpack.c.b16 %v1190, %v1185
        %v1211 = vpack.c.b16 %v1191, %v1186
        %v1212 = vpack.c.b16 %v1192, %v1187
        %v1213 = vpack.c.b16 %v1193, %v1188
        %vm1230 = vcmask 523264
        %v1232 = vsel %vm1230, %v1198, 0
        %v1235 = vsel %vm1230, %v1203, 0
        %v1238 = vsel %vm1230, %v1208, 0
        %v1241 = vsel %vm1230, %v1213, 0
        %1243 = vmatprep.subr.bf16.mxu0 0
        %1244 = vmatpush1.bf16.msra.mxu0 %v1046
        %1245 = vmatprep.subr.bf16.mxu0 0
        %1246 = vmatpush1.bf16.msra.mxu0 %v1047
        %1247 = vmatprep.subr.bf16.mxu0 0
        %1248 = vmatpush1.bf16.msra.mxu0 %v1048
        %1249 = vmatprep.subr.bf16.mxu0 0
        %1250 = vmatpush1.bf16.msra.mxu0 %v1049
        %1251 = vmatprep.subr.bf16.mxu0 0
        %1252 = vmatpush1.bf16.msra.mxu0 %v1050
        %1253 = vmatprep.subr.bf16.mxu0 0
        %1254 = vmatpush1.bf16.msra.mxu0 %v1051
        %1255 = vmatprep.subr.bf16.mxu0 0
        %1256 = vmatpush1.bf16.msra.mxu0 %v1052
        %1257 = vmatprep.subr.bf16.mxu0 0
        %1258 = vmatpush1.bf16.msra.mxu0 %v1053
        %1259 = vmatprep.subr.bf16.mxu0 0
        %1260 = vmatpush1.bf16.msra.mxu0 %v1054
        %1261 = vmatprep.subr.bf16.mxu0 0
        %1262 = vmatpush1.bf16.msra.mxu0 %v1055
        %1263 = vmatprep.subr.bf16.mxu0 0
        %1264 = vmatpush1.bf16.msra.mxu0 %v1056
        %1265 = vmatprep.subr.bf16.mxu0 0
        %1266 = vmatpush1.bf16.msra.mxu0 %v1057
        %1267 = vmatprep.subr.bf16.mxu0 0
        %1268 = vmatpush1.bf16.msra.mxu0 %v1058
        %1269 = vmatprep.subr.bf16.mxu0 0
        %1270 = vmatpush1.bf16.msra.mxu0 %v1059
        %1271 = vmatprep.subr.bf16.mxu0 0
        %1272 = vmatpush1.bf16.msra.mxu0 %v1060
        %1273 = vmatprep.subr.bf16.mxu0 0
        %1274 = vmatpush1.bf16.msra.mxu0 %v1061
        %1275 = vmatprep.mubr.bf16.mxu0 %v1195
        %1276 = vmatmul.mubr.bf16.gmra.mrb[0].mxu0 %v1194
        %v1277 = vpop.f32.mrb[0].mxu0
        %v1278 = vadd.f32 %v1093, %v1277
        %v1279 = vpop.f32.mrb[0].mxu0
        %v1280 = vpop.f32.mrb[0].mxu0
        %v1281 = vadd.f32 %v1098, %v1280
        %v1282 = vpop.f32.mrb[0].mxu0
        %1283 = vmatprep.mubr.bf16.mxu0 %v1200
        %1284 = vmatmul.mubr.bf16.gmra.mrb[0].mxu0 %v1199
        %v1285 = vpop.f32.mrb[0].mxu0
        %v1286 = vadd.f32 %v1103, %v1285
        %v1287 = vpop.f32.mrb[0].mxu0
        %v1288 = vpop.f32.mrb[0].mxu0
        %v1289 = vadd.f32 %v1108, %v1288
        %v1290 = vpop.f32.mrb[0].mxu0
        %1291 = vmatprep.mubr.bf16.mxu0 %v1205
        %1292 = vmatmul.mubr.bf16.gmra.mrb[0].mxu0 %v1204
        %v1293 = vpop.f32.mrb[0].mxu0
        %v1294 = vadd.f32 %v1113, %v1293
        %v1295 = vpop.f32.mrb[0].mxu0
        %v1296 = vpop.f32.mrb[0].mxu0
        %v1297 = vadd.f32 %v1118, %v1296
        %v1298 = vpop.f32.mrb[0].mxu0
        %1299 = vmatprep.mubr.bf16.mxu0 %v1210
        %1300 = vmatmul.mubr.bf16.gmra.mrb[0].mxu0 %v1209
        %v1301 = vpop.f32.mrb[0].mxu0
        %v1302 = vadd.f32 %v1123, %v1301
        %v1303 = vpop.f32.mrb[0].mxu0
        %v1304 = vpop.f32.mrb[0].mxu0
        %v1305 = vadd.f32 %v1128, %v1304
        %v1306 = vpop.f32.mrb[0].mxu0
        %1307 = vdwg.mxu0
        %1308 = vmatprep.subr.bf16.mxu0 0
        %1309 = vmatpush1.bf16.msra.mxu0 %v1062
        %1310 = vmatprep.subr.bf16.mxu0 0
        %1311 = vmatpush1.bf16.msra.mxu0 %v1063
        %1312 = vmatprep.subr.bf16.mxu0 0
        %1313 = vmatpush1.bf16.msra.mxu0 %v1064
        %1314 = vmatprep.subr.bf16.mxu0 0
        %1315 = vmatpush1.bf16.msra.mxu0 %v1065
        %1316 = vmatprep.subr.bf16.mxu0 0
        %1317 = vmatpush1.bf16.msra.mxu0 %v1066
        %1318 = vmatprep.subr.bf16.mxu0 0
        %1319 = vmatpush1.bf16.msra.mxu0 %v1067
        %1320 = vmatprep.subr.bf16.mxu0 0
        %1321 = vmatpush1.bf16.msra.mxu0 %v1068
        %1322 = vmatprep.subr.bf16.mxu0 0
        %1323 = vmatpush1.bf16.msra.mxu0 %v1069
        %1324 = vmatprep.subr.bf16.mxu0 0
        %1325 = vmatpush1.bf16.msra.mxu0 %v1070
        %1326 = vmatprep.subr.bf16.mxu0 0
        %1327 = vmatpush1.bf16.msra.mxu0 %v1071
        %1328 = vmatprep.subr.bf16.mxu0 0
        %1329 = vmatpush1.bf16.msra.mxu0 %v1072
        %1330 = vmatprep.subr.bf16.mxu0 0
        %1331 = vmatpush1.bf16.msra.mxu0 %v1073
        %1332 = vmatprep.subr.bf16.mxu0 0
        %1333 = vmatpush1.bf16.msra.mxu0 %v1074
        %1334 = vmatprep.subr.bf16.mxu0 0
        %1335 = vmatpush1.bf16.msra.mxu0 %v1075
        %1336 = vmatprep.subr.bf16.mxu0 0
        %1337 = vmatpush1.bf16.msra.mxu0 %v1076
        %1338 = vmatprep.subr.bf16.mxu0 0
        %1339 = vmatpush1.bf16.msra.mxu0 %v1077
        %1340 = vmatprep.mubr.bf16.mxu0 %v1197
        %1341 = vmatmul.mubr.bf16.gmra.mrb[0].mxu0 %v1196
        %v1342 = vpop.f32.mrb[0].mxu0
        %v1343 = vadd.f32 %v1278, %v1342
        %v1344 = vpop.f32.mrb[0].mxu0
        %v1345 = vpop.f32.mrb[0].mxu0
        %v1346 = vadd.f32 %v1281, %v1345
        %v1347 = vpop.f32.mrb[0].mxu0
        %1348 = vmatprep.mubr.bf16.mxu0 %v1202
        %1349 = vmatmul.mubr.bf16.gmra.mrb[0].mxu0 %v1201
        %v1350 = vpop.f32.mrb[0].mxu0
        %v1351 = vadd.f32 %v1286, %v1350
        %v1352 = vpop.f32.mrb[0].mxu0
        %v1353 = vpop.f32.mrb[0].mxu0
        %v1354 = vadd.f32 %v1289, %v1353
        %v1355 = vpop.f32.mrb[0].mxu0
        %1356 = vmatprep.mubr.bf16.mxu0 %v1207
        %1357 = vmatmul.mubr.bf16.gmra.mrb[0].mxu0 %v1206
        %v1358 = vpop.f32.mrb[0].mxu0
        %v1359 = vadd.f32 %v1294, %v1358
        %v1360 = vpop.f32.mrb[0].mxu0
        %v1361 = vpop.f32.mrb[0].mxu0
        %v1362 = vadd.f32 %v1297, %v1361
        %v1363 = vpop.f32.mrb[0].mxu0
        %1364 = vmatprep.mubr.bf16.mxu0 %v1212
        %1365 = vmatmul.mubr.bf16.gmra.mrb[0].mxu0 %v1211
        %v1366 = vpop.f32.mrb[0].mxu0
        %v1367 = vadd.f32 %v1302, %v1366
        %v1368 = vpop.f32.mrb[0].mxu0
        %v1369 = vpop.f32.mrb[0].mxu0
        %v1370 = vadd.f32 %v1305, %v1369
        %v1371 = vpop.f32.mrb[0].mxu0
        %1372 = vdwg.mxu0
        %1373 = vmatprep.subr.bf16.mxu0 0
        %1374 = vmatpush1.bf16.msra.mxu0 %v1078
        %1375 = vmatprep.subr.bf16.mxu0 0
        %1376 = vmatpush1.bf16.msra.mxu0 %v1079
        %1377 = vmatprep.subr.bf16.mxu0 0
        %1378 = vmatpush1.bf16.msra.mxu0 %v1080
        %1379 = vmatprep.subr.bf16.mxu0 0
        %1380 = vmatpush1.bf16.msra.mxu0 %v1081
        %1381 = vmatprep.subr.bf16.mxu0 0
        %1382 = vmatpush1.bf16.msra.mxu0 0
        %1383 = vmatprep.subr.bf16.mxu0 0
        %1384 = vmatpush1.bf16.msra.mxu0 0
        %1385 = vmatprep.subr.bf16.mxu0 0
        %1386 = vmatpush1.bf16.msra.mxu0 0
        %1387 = vmatprep.subr.bf16.mxu0 0
        %1388 = vmatpush1.bf16.msra.mxu0 0
        %1389 = vmatprep.subr.bf16.mxu0 0
        %1390 = vmatpush1.bf16.msra.mxu0 0
        %1391 = vmatprep.subr.bf16.mxu0 0
        %1392 = vmatpush1.bf16.msra.mxu0 0
        %1393 = vmatprep.subr.bf16.mxu0 0
        %1394 = vmatpush1.bf16.msra.mxu0 0
        %1395 = vmatprep.subr.bf16.mxu0 0
        %1396 = vmatpush1.bf16.msra.mxu0 0
        %1397 = vmatprep.subr.bf16.mxu0 0
        %1398 = vmatpush1.bf16.msra.mxu0 0
        %1399 = vmatprep.subr.bf16.mxu0 0
        %1400 = vmatpush1.bf16.msra.mxu0 0
        %1401 = vmatprep.subr.bf16.mxu0 0
        %1402 = vmatpush1.bf16.msra.mxu0 0
        %1403 = vmatprep.subr.bf16.mxu0 0
        %1404 = vmatpush1.bf16.msra.mxu0 0
        %1405 = vmatprep.mubr.bf16.mxu0 0
        %1406 = vmatmul.mubr.bf16.gmra.mrb[0].mxu0 %v1232
        %v1407 = vpop.f32.mrb[0].mxu0
        %v1408 = vadd.f32 %v1343, %v1407
        %v1409 = vpop.f32.mrb[0].mxu0
        %v1410 = vpop.f32.mrb[0].mxu0
        %v1411 = vadd.f32 %v1346, %v1410
        %v1412 = vpop.f32.mrb[0].mxu0
        %1413 = vmatprep.mubr.bf16.mxu0 0
        %1414 = vmatmul.mubr.bf16.gmra.mrb[0].mxu0 %v1235
        %v1415 = vpop.f32.mrb[0].mxu0
        %v1416 = vadd.f32 %v1351, %v1415
        %v1417 = vpop.f32.mrb[0].mxu0
        %v1418 = vpop.f32.mrb[0].mxu0
        %v1419 = vadd.f32 %v1354, %v1418
        %v1420 = vpop.f32.mrb[0].mxu0
        %1421 = vmatprep.mubr.bf16.mxu0 0
        %1422 = vmatmul.mubr.bf16.gmra.mrb[0].mxu0 %v1238
        %v1423 = vpop.f32.mrb[0].mxu0
        %v1424 = vadd.f32 %v1359, %v1423
        %v1425 = vpop.f32.mrb[0].mxu0
        %v1426 = vpop.f32.mrb[0].mxu0
        %v1427 = vadd.f32 %v1362, %v1426
        %v1428 = vpop.f32.mrb[0].mxu0
        %1429 = vmatprep.mubr.bf16.mxu0 0
        %1430 = vmatmul.mubr.bf16.gmra.mrb[0].mxu0 %v1241
        %v1431 = vpop.f32.mrb[0].mxu0
        %v1432 = vadd.f32 %v1367, %v1431
        %v1433 = vpop.f32.mrb[0].mxu0
        %v1434 = vpop.f32.mrb[0].mxu0
        %v1435 = vadd.f32 %v1370, %v1434
        %v1436 = vpop.f32.mrb[0].mxu0
        %1437 = vdwg.mxu0
        %v1438 = vmax.f32 %v1408, 0.0
        %v1439 = vmax.f32 %v1411, 0.0
        %v1440 = vmax.f32 %v1416, 0.0
        %v1441 = vmax.f32 %v1419, 0.0
        %v1442 = vmax.f32 %v1424, 0.0
        %v1443 = vmax.f32 %v1427, 0.0
        %v1444 = vmax.f32 %v1432, 0.0
        %v1445 = vmax.f32 %v1435, 0.0
        %v1446 = vmul.f32 %v1438, %v1438
        %v1447 = vmul.f32 %v1439, %v1439
        %v1448 = vmul.f32 %v1440, %v1440
        %v1449 = vmul.f32 %v1441, %v1441
        %v1450 = vmul.f32 %v1442, %v1442
        %v1451 = vmul.f32 %v1443, %v1443
        %v1452 = vmul.f32 %v1444, %v1444
        %v1453 = vmul.f32 %v1445, %v1445
        %v1454 = vadd.f32 %v1446, %v1447
        %v1455 = vadd.f32 %v1454, %v1448
        %v1456 = vadd.f32 %v1455, %v1449
        %v1457 = vadd.f32 %v1456, %v1450
        %v1458 = vadd.f32 %v1457, %v1451
        %v1459 = vadd.f32 %v1458, %v1452
        %v1460 = vadd.f32 %v1459, %v1453
        %v1461 = vrot.slane %v1460, 4
        %v1462 = vadd.f32 %v1460, %v1461
        %v1463 = vrot.slane %v1462, 2
        %v1464 = vadd.f32 %v1462, %v1463
        %v1465 = vrot.slane %v1464, 1
        %v1466 = vadd.f32 %v1464, %v1465
        %v1467 = vadd.f32 %v1466, 1e-20
        %v1468 = vrsqrt.pop %v1467
        %v1469 = vmul.f32 %v1438, %v1468
        %v1470 = vmul.f32 %v1439, %v1468
        %v1471 = vmul.f32 %v1440, %v1468
        %v1472 = vmul.f32 %v1441, %v1468
        %v1473 = vmul.f32 %v1442, %v1468
        %v1474 = vmul.f32 %v1443, %v1468
        %v1475 = vmul.f32 %v1444, %v1468
        %v1476 = vmul.f32 %v1445, %v1468
        %1477 = vst [vmem:[%s237] sm:$0xff] %v1469
        %1478 = vst [vmem:[%s237 + $0x8] sm:$0xff] %v1470
        %1479 = vst [vmem:[%s237 + $0x10] sm:$0xff] %v1471
        %1480 = vst [vmem:[%s237 + $0x18] sm:$0xff] %v1472
        %1481 = vst [vmem:[%s237 + $0x20] sm:$0xff] %v1473
        %1482 = vst [vmem:[%s237 + $0x28] sm:$0xff] %v1474
        %1483 = vst [vmem:[%s237 + $0x30] sm:$0xff] %v1475
        %1484 = vst [vmem:[%s237 + $0x38] sm:$0xff] %v1476
        %s1485 = sand.u32 %s150, 1
        %s1486 = sand.u32 %s150, 1
        %s1487 = smul.addr %s1486, 64
        %s1488 = scalar_lea.vmem [#allocation4], %s1487
        // Predicated region
        $region49: #{perceptual_features.1} parent=39 // pred_check
          %p1489 = pneg %p160
        $region50: #{perceptual_features.1} parent=39 // pred_check_branch
          %1491 = sbr.rel (%p1489) target = $region52
        $region51: #{perceptual_features.1} parent=39 // pred_region
          %s1492 = smul.addr %s20, 32
          %s1493 = sadd.s32 %s21, %s1492
          %s1494 = smul.addr %s1493, 8
          %s1495 = scalar_lea.vmem %s5, %s1494
          // Predicated region
          $region53: #{perceptual_features.1} parent=51 // pred_check
            _
          $region54: #{perceptual_features.1} parent=51 // pred_check_branch
            %1497 = sbr.rel (0) target = $region56
          $region55: #{perceptual_features.1} parent=51 // pred_region
            // Predicated region
            $region57: #{perceptual_features.1} parent=55 // pred_check
              _
            $region58: #{perceptual_features.1} parent=55 // pred_check_branch
              %1499 = sbr.rel (0) target = $region60
            $region59: #{perceptual_features.1} parent=55 // pred_region
              // Predicated region
              $region72: #{perceptual_features.1} parent=59 // pred_check
                _
              $region73: #{perceptual_features.1} parent=59 // pred_check_branch
                %1528 = sbr.rel (0) target = $region75
              $region74: #{perceptual_features.1} parent=59 // pred_region
                loop: start=0, step=1, limit=1
                $region76: #{perceptual_features.1} parent=74 // loop_pre_header
                  _
                $region77: #{perceptual_features.1} parent=74 // loop_header
                  %s1530 = sphi 0, %s1534
                  %p1531 = scmp.ge.s32.totalorder %s1530, 1
                  %s1535 = sphi %s1488, %s1488
                  %s1536 = sphi %s1495, %s1495
                $region78: #{perceptual_features.1} parent=74 // loop_header_branch
                  %1533 = sbr.rel (%p1531) target = $region82
                $region79: #{perceptual_features.1} parent=74 // loop_body
                  %v1537 = vld [vmem:[%s1535] sm:$0xff]
                  %1538 = vst [vmem:[%s1536] sm:$0xff] %v1537
                  %v1539 = vld [vmem:[%s1535 + $0x8] sm:$0xff]
                  %1540 = vst [vmem:[%s1536 + $0x20] sm:$0xff] %v1539
                  %v1541 = vld [vmem:[%s1535 + $0x10] sm:$0xff]
                  %1542 = vst [vmem:[%s1536 + $0x40] sm:$0xff] %v1541
                  %v1543 = vld [vmem:[%s1535 + $0x18] sm:$0xff]
                  %1544 = vst [vmem:[%s1536 + $0x60] sm:$0xff] %v1543
                  %v1545 = vld [vmem:[%s1535 + $0x20] sm:$0xff]
                  %1546 = vst [vmem:[%s1536 + $0x80] sm:$0xff] %v1545
                  %v1547 = vld [vmem:[%s1535 + $0x28] sm:$0xff]
                  %1548 = vst [vmem:[%s1536 + $0xa0] sm:$0xff] %v1547
                  %v1549 = vld [vmem:[%s1535 + $0x30] sm:$0xff]
                  %1550 = vst [vmem:[%s1536 + $0xc0] sm:$0xff] %v1549
                  %v1551 = vld [vmem:[%s1535 + $0x38] sm:$0xff]
                  %1552 = vst [vmem:[%s1536 + $0xe0] sm:$0xff] %v1551
                $region80: #{perceptual_features.1} parent=74 // loop_footer
                  %s1534 = sadd.s32 1, %s1530
                $region81: #{perceptual_features.1} parent=74 // loop_footer_branch
                  %1529 = sbr.rel target = $region77
                $region82: #{perceptual_features.1} parent=74 // loop_exit
                  _
              $region75: #{perceptual_features.1} parent=59 // pred_fallthru
                _
              // Predicated region
              $region83: #{perceptual_features.1} parent=59 // pred_check
                _
              $region84: #{perceptual_features.1} parent=59 // pred_check_branch
                %1554 = sbr.rel target = $region86
              $region85: #{perceptual_features.1} parent=59 // pred_region
                _
              $region86: #{perceptual_features.1} parent=59 // pred_fallthru
                _
            $region60: #{perceptual_features.1} parent=55 // pred_fallthru
              _
            // Predicated region
            $region61: #{perceptual_features.1} parent=55 // pred_check
              _
            $region62: #{perceptual_features.1} parent=55 // pred_check_branch
              %1501 = sbr.rel target = $region64
            $region63: #{perceptual_features.1} parent=55 // pred_region
              loop: start=0, step=1, limit=1
              $region65: #{perceptual_features.1} parent=63 // loop_pre_header
                _
              $region66: #{perceptual_features.1} parent=63 // loop_header
                %s1504 = sphi 0, %s1508
                %p1505 = scmp.ge.s32.totalorder %s1504, 1
                %s1509 = sphi %s1488, %s1488
                %s1510 = sphi %s1495, %s1495
              $region67: #{perceptual_features.1} parent=63 // loop_header_branch
                %1507 = sbr.rel (%p1505) target = $region71
              $region68: #{perceptual_features.1} parent=63 // loop_body
                %v1511 = vld [vmem:[%s1509] sm:$0xff]
                %1512 = vst [vmem:[%s1510] sm:$0xff] %v1511
                %v1513 = vld [vmem:[%s1509 + $0x8] sm:$0xff]
                %1514 = vst [vmem:[%s1510 + $0x20] sm:$0xff] %v1513
                %v1515 = vld [vmem:[%s1509 + $0x10] sm:$0xff]
                %1516 = vst [vmem:[%s1510 + $0x40] sm:$0xff] %v1515
                %v1517 = vld [vmem:[%s1509 + $0x18] sm:$0xff]
                %1518 = vst [vmem:[%s1510 + $0x60] sm:$0xff] %v1517
                %v1519 = vld [vmem:[%s1509 + $0x20] sm:$0xff]
                %1520 = vst [vmem:[%s1510 + $0x80] sm:$0xff] %v1519
                %v1521 = vld [vmem:[%s1509 + $0x28] sm:$0xff]
                %1522 = vst [vmem:[%s1510 + $0xa0] sm:$0xff] %v1521
                %v1523 = vld [vmem:[%s1509 + $0x30] sm:$0xff]
                %1524 = vst [vmem:[%s1510 + $0xc0] sm:$0xff] %v1523
                %v1525 = vld [vmem:[%s1509 + $0x38] sm:$0xff]
                %1526 = vst [vmem:[%s1510 + $0xe0] sm:$0xff] %v1525
              $region69: #{perceptual_features.1} parent=63 // loop_footer
                %s1508 = sadd.s32 1, %s1504
              $region70: #{perceptual_features.1} parent=63 // loop_footer_branch
                %1503 = sbr.rel target = $region66
              $region71: #{perceptual_features.1} parent=63 // loop_exit
                _
            $region64: #{perceptual_features.1} parent=55 // pred_fallthru
              _
          $region56: #{perceptual_features.1} parent=51 // pred_fallthru
            _
          %1555 = vnop
        $region52: #{perceptual_features.1} parent=39 // pred_fallthru
          _
      $region40: #{perceptual_features.1} parent=5 // pred_fallthru
        _
      %p1556 = scmp.le.s32.totalorder 2, %s11
      // Predicated region
      $region87: #{perceptual_features.1} parent=5 // pred_check
        %p1557 = pneg %p1556
      $region88: #{perceptual_features.1} parent=5 // pred_check_branch
        %1559 = sbr.rel (%p1557) target = $region90
      $region89: #{perceptual_features.1} parent=5 // pred_region
        %s1560 = ssub.s32 %s11, 2
        // Predicated region
        $region91: #{perceptual_features.1} parent=89 // pred_check
          %p1561 = pneg %p166
        $region92: #{perceptual_features.1} parent=89 // pred_check_branch
          %1563 = sbr.rel (%p1561) target = $region94
        $region93: #{perceptual_features.1} parent=89 // pred_region
          %s1564 = sand.u32 %s151, 1
          %s1565 = sand.u32 %s151, 1
          %s1566 = smul.addr %s1565, 64
          %s1567 = scalar_lea.vmem [#allocation4], %s1566
        $region94: #{perceptual_features.1} parent=89 // pred_fallthru
          _
      $region90: #{perceptual_features.1} parent=5 // pred_fallthru
        _
    $region6: #{perceptual_features.1} parent=1 // loop_footer
      %s15 = sadd.s32 1, %s11
    $region7: #{perceptual_features.1} parent=1 // loop_footer_branch
      %10 = sbr.rel target = $region3
    $region8: #{perceptual_features.1} parent=1 // loop_exit
      _

</llo_original>
